<compile_context>
chip_gen: v6e
topology: v6e:2x2x1
jax: 0.10.0
libtpu: 0.0.40
codegen_flags: <defaults>
</compile_context>

<pallas_src>
import numpy as np
import jax
import jax.numpy as jnp
from jax.experimental import pallas as pl
from jax.experimental.pallas import tpu as pltpu


# ----------------------------------------------------------------------------
# Kernel 1: reflection pad + 3x3 conv (+ bias) as a single MXU matmul,
#           plus per-batch-item per-channel sum / sum-of-squares.
# ----------------------------------------------------------------------------
def _conv_stats_kernel(x_ref, w_ref, b_ref, out_ref, stats_ref):
    H, W, Cin = x_ref.shape[1], x_ref.shape[2], x_ref.shape[3]

    x = x_ref[0]                                                    # (H, W, Cin)

    # ReflectionPad2d(1): pad H (leading axis) then W (sublane axis).
    xh = jnp.concatenate([x[1:2], x, x[H - 2:H - 1]], axis=0)       # (H+2, W, Cin)
    xp = jnp.concatenate(
        [xh[:, 1:2, :], xh, xh[:, W - 2:W - 1, :]], axis=1)         # (H+2, W+2, Cin)

    # im2col: 9 shifted windows concatenated on the channel (lane) axis,
    # then a layout-preserving flatten of the leading (H, W) dims.
    cols = [xp[dy:dy + H, dx:dx + W, :] for dy in range(3) for dx in range(3)]
    patches = jnp.concatenate(cols, axis=-1)                        # (H, W, 9*Cin)
    patches = patches.reshape(H * W, 9 * Cin)                       # (H*W, 9*Cin)

    # 3x3 conv == one MXU matmul with f32 accumulation, + bias.
    acc = jnp.dot(patches, w_ref[...],
                  preferred_element_type=jnp.float32)               # (H*W, Cout)
    acc = acc + b_ref[...]                                          # (1, Cout) bcast
    out_ref[0] = acc

    # Per-channel batch statistics for this batch item (single store).
    s = jnp.sum(acc, axis=0, keepdims=True)                         # (1, Cout)
    sq = jnp.sum(acc * acc, axis=0, keepdims=True)                  # (1, Cout)
    stats_ref[0] = jnp.concatenate([s, sq], axis=0)                 # (2, Cout)


# ----------------------------------------------------------------------------
# Kernel 2: BatchNorm affine (precomputed per-channel scale/shift) + ReLU,
#           written in place over the conv intermediate (aliased).
# ----------------------------------------------------------------------------
def _bn_relu_kernel(y_ref, scale_ref, shift_ref, out_ref):
    out_ref[0] = jnp.maximum(y_ref[0] * scale_ref[...] + shift_ref[...], 0.0)


# ----------------------------------------------------------------------------
# Wrapper (NCHW in, NCHW out — matches the PyTorch module).
# ----------------------------------------------------------------------------
def conv_block(x, weight, bias, gamma, beta, eps=1e-5):
    x = x.astype(jnp.float32)
    N, Cin, H, W = x.shape
    Cout = weight.shape[0]
    HW = H * W

    # Layout plumbing (wrapper-side): NCHW -> NHWC, conv weights -> (9*Cin, Cout)
    # with row order (dy, dx, cin) matching the in-kernel im2col concat order.
    x_nhwc = jnp.transpose(x, (0, 2, 3, 1))                              # (N,H,W,Cin)
    w_mat = jnp.transpose(weight.astype(jnp.float32), (2, 3, 1, 0)).reshape(9 * Cin, Cout)
    b_row = bias.astype(jnp.float32).reshape(1, Cout)

    cparams = pltpu.CompilerParams(
        dimension_semantics=("parallel",),
        vmem_limit_bytes=32 * 1024 * 1024,
    )

    conv_flat, stats = pl.pallas_call(
        _conv_stats_kernel,
        out_shape=(
            jax.ShapeDtypeStruct((N, HW, Cout), jnp.float32),
            jax.ShapeDtypeStruct((N, 2, Cout), jnp.float32),
        ),
        grid_spec=pltpu.PrefetchScalarGridSpec(
            num_scalar_prefetch=0,
            grid=(N,),
            in_specs=[
                pl.BlockSpec((1, H, W, Cin), lambda n: (n, 0, 0, 0)),
                pl.BlockSpec((9 * Cin, Cout), lambda n: (0, 0)),
                pl.BlockSpec((1, Cout), lambda n: (0, 0)),
            ],
            out_specs=[
                pl.BlockSpec((1, HW, Cout), lambda n: (n, 0, 0)),
                pl.BlockSpec((1, 2, Cout), lambda n: (n, 0, 0)),
            ],
        ),
        compiler_params=cparams,
    )(x_nhwc, w_mat, b_row)

    # BatchNorm (training mode): biased batch statistics over (N, H, W).
    cnt = jnp.float32(N * HW)
    mean = jnp.sum(stats[:, 0, :], axis=0) / cnt
    var = jnp.maximum(jnp.sum(stats[:, 1, :], axis=0) / cnt - mean * mean, 0.0)
    scale = gamma.astype(jnp.float32) / jnp.sqrt(var + eps)
    shift = beta.astype(jnp.float32) - mean * scale

    out_flat = pl.pallas_call(
        _bn_relu_kernel,
        out_shape=jax.ShapeDtypeStruct((N, HW, Cout), jnp.float32),
        grid_spec=pltpu.PrefetchScalarGridSpec(
            num_scalar_prefetch=0,
            grid=(N,),
            in_specs=[
                pl.BlockSpec((1, HW, Cout), lambda n: (n, 0, 0)),
                pl.BlockSpec((1, Cout), lambda n: (0, 0)),
                pl.BlockSpec((1, Cout), lambda n: (0, 0)),
            ],
            out_specs=pl.BlockSpec((1, HW, Cout), lambda n: (n, 0, 0)),
        ),
        input_output_aliases={0: 0},        # BN+ReLU written in place over conv_flat
        compiler_params=cparams,
    )(conv_flat, scale.reshape(1, Cout), shift.reshape(1, Cout))

    out = out_flat.reshape(N, H, W, Cout)
    return jnp.transpose(out, (0, 3, 1, 2))                              # NCHW


# ----------------------------------------------------------------------------
# Pure-JAX reference (for correctness check)
# ----------------------------------------------------------------------------
def conv_block_reference(x, weight, bias, gamma, beta, eps=1e-5):
    xp = jnp.pad(x, ((0, 0), (0, 0), (1, 1), (1, 1)), mode='reflect')
    y = jax.lax.conv_general_dilated(
        xp, weight, window_strides=(1, 1), padding='VALID',
        dimension_numbers=('NCHW', 'OIHW', 'NCHW'))
    y = y + bias[None, :, None, None]
    mean = y.mean(axis=(0, 2, 3), keepdims=True)
    var = y.var(axis=(0, 2, 3), keepdims=True)          # biased, training-mode BN
    z = (y - mean) / jnp.sqrt(var + eps)
    z = z * gamma[None, :, None, None] + beta[None, :, None, None]
    return jnp.maximum(z, 0.0)


if __name__ == "__main__":
    key = jax.random.PRNGKey(0)
    k_x, k_w, k_b = jax.random.split(key, 3)

    N, Cin, Cout, H, W = 2, 4, 8, 16, 16
    x = jax.random.normal(k_x, (N, Cin, H, W), dtype=jnp.float32)
    weight = jax.random.normal(k_w, (Cout, Cin, 3, 3), dtype=jnp.float32) * 0.1
    bias = jax.random.normal(k_b, (Cout,), dtype=jnp.float32) * 0.1
    gamma = jnp.ones((Cout,), jnp.float32)   # BatchNorm2d default affine init
    beta = jnp.zeros((Cout,), jnp.float32)

    out = jax.jit(conv_block)(x, weight, bias, gamma, beta)
    out = jax.block_until_ready(out)

    ref = conv_block_reference(x, weight, bias, gamma, beta)
    ref = jax.block_until_ready(ref)

    assert out.shape == (N, Cout, H, W), out.shape
    np.testing.assert_allclose(np.asarray(out), np.asarray(ref), rtol=1e-3, atol=1e-3)

    print("KERNEL_OK")
</pallas_src>

<mosaic_0001>
module attributes {stable_mosaic.version = 11 : i64} {
  func.func @_conv_stats_kernel(%arg0: i32, %arg1: memref<1x16x16x4xf32, #tpu.memory_space<vmem>>, %arg2: memref<36x8xf32, #tpu.memory_space<vmem>>, %arg3: memref<1x8xf32, #tpu.memory_space<vmem>>, %arg4: memref<1x256x8xf32, #tpu.memory_space<vmem>>, %arg5: memref<1x2x8xf32, #tpu.memory_space<vmem>>) attributes {dimension_semantics = [#tpu.dimension_semantics<parallel>], iteration_bounds = array<i64: 2>, scalar_prefetch = 0 : i64, scratch_operands = 0 : i64, tpu.core_type = #tpu.core_type<tc>, window_params = [{transform_indices = @transform_0, window_bounds = array<i64: 1, 16, 16, 4>}, {pipeline_mode = #tpu.pipeline_mode<synchronous>, transform_indices = @transform_1, window_bounds = array<i64: 36, 8>}, {pipeline_mode = #tpu.pipeline_mode<synchronous>, transform_indices = @transform_2, window_bounds = array<i64: 1, 8>}, {transform_indices = @transform_3, window_bounds = array<i64: 1, 256, 8>}, {transform_indices = @transform_4, window_bounds = array<i64: 1, 2, 8>}]} {
    %c0 = arith.constant 0 : index
    %c0_0 = arith.constant 0 : index
    %c0_1 = arith.constant 0 : index
    %c0_2 = arith.constant 0 : index
    %0 = vector.load %arg1[%c0, %c0_0, %c0_1, %c0_2] : memref<1x16x16x4xf32, #tpu.memory_space<vmem>>, vector<1x16x16x4xf32>
    %1 = vector.shape_cast %0 : vector<1x16x16x4xf32> to vector<16x16x4xf32>
    %2 = vector.extract_strided_slice %1 {offsets = [1, 0, 0], sizes = [1, 16, 4], strides = [1, 1, 1]} : vector<16x16x4xf32> to vector<1x16x4xf32>
    %3 = vector.extract_strided_slice %1 {offsets = [14, 0, 0], sizes = [1, 16, 4], strides = [1, 1, 1]} : vector<16x16x4xf32> to vector<1x16x4xf32>
    %4 = tpu.concatenate %2, %1, %3 in 0 : vector<1x16x4xf32>, vector<16x16x4xf32>, vector<1x16x4xf32> -> vector<18x16x4xf32>
    %5 = vector.extract_strided_slice %4 {offsets = [0, 1, 0], sizes = [18, 1, 4], strides = [1, 1, 1]} : vector<18x16x4xf32> to vector<18x1x4xf32>
    %6 = vector.extract_strided_slice %4 {offsets = [0, 14, 0], sizes = [18, 1, 4], strides = [1, 1, 1]} : vector<18x16x4xf32> to vector<18x1x4xf32>
    %7 = tpu.concatenate %5, %4, %6 in 1 : vector<18x1x4xf32>, vector<18x16x4xf32>, vector<18x1x4xf32> -> vector<18x18x4xf32>
    %8 = vector.extract_strided_slice %7 {offsets = [0, 0, 0], sizes = [16, 16, 4], strides = [1, 1, 1]} : vector<18x18x4xf32> to vector<16x16x4xf32>
    %9 = vector.extract_strided_slice %7 {offsets = [0, 1, 0], sizes = [16, 16, 4], strides = [1, 1, 1]} : vector<18x18x4xf32> to vector<16x16x4xf32>
    %10 = vector.extract_strided_slice %7 {offsets = [0, 2, 0], sizes = [16, 16, 4], strides = [1, 1, 1]} : vector<18x18x4xf32> to vector<16x16x4xf32>
    %11 = vector.extract_strided_slice %7 {offsets = [1, 0, 0], sizes = [16, 16, 4], strides = [1, 1, 1]} : vector<18x18x4xf32> to vector<16x16x4xf32>
    %12 = vector.extract_strided_slice %7 {offsets = [1, 1, 0], sizes = [16, 16, 4], strides = [1, 1, 1]} : vector<18x18x4xf32> to vector<16x16x4xf32>
    %13 = vector.extract_strided_slice %7 {offsets = [1, 2, 0], sizes = [16, 16, 4], strides = [1, 1, 1]} : vector<18x18x4xf32> to vector<16x16x4xf32>
    %14 = vector.extract_strided_slice %7 {offsets = [2, 0, 0], sizes = [16, 16, 4], strides = [1, 1, 1]} : vector<18x18x4xf32> to vector<16x16x4xf32>
    %15 = vector.extract_strided_slice %7 {offsets = [2, 1, 0], sizes = [16, 16, 4], strides = [1, 1, 1]} : vector<18x18x4xf32> to vector<16x16x4xf32>
    %16 = vector.extract_strided_slice %7 {offsets = [2, 2, 0], sizes = [16, 16, 4], strides = [1, 1, 1]} : vector<18x18x4xf32> to vector<16x16x4xf32>
    %17 = tpu.concatenate %8, %9, %10, %11, %12, %13, %14, %15, %16 in 2 : vector<16x16x4xf32>, vector<16x16x4xf32>, vector<16x16x4xf32>, vector<16x16x4xf32>, vector<16x16x4xf32>, vector<16x16x4xf32>, vector<16x16x4xf32>, vector<16x16x4xf32>, vector<16x16x4xf32> -> vector<16x16x36xf32>
    %18 = vector.shape_cast %17 : vector<16x16x36xf32> to vector<256x36xf32>
    %c0_3 = arith.constant 0 : index
    %c0_4 = arith.constant 0 : index
    %19 = vector.load %arg2[%c0_3, %c0_4] : memref<36x8xf32, #tpu.memory_space<vmem>>, vector<36x8xf32>
    %cst = arith.constant dense<0.000000e+00> : vector<256x8xf32>
    %20 = tpu.matmul %18, %19, %cst {dimension_numbers = #tpu.dot_dimension_numbers<[1], [0], [0], [1], [0, 0, 1, 1], [], []>} : vector<256x36xf32>, vector<36x8xf32>, vector<256x8xf32> -> vector<256x8xf32>
    %c0_5 = arith.constant 0 : index
    %c0_6 = arith.constant 0 : index
    %21 = vector.load %arg3[%c0_5, %c0_6] : memref<1x8xf32, #tpu.memory_space<vmem>>, vector<1x8xf32>
    %22 = vector.broadcast %21 : vector<1x8xf32> to vector<256x8xf32>
    %23 = arith.addf %20, %22 : vector<256x8xf32>
    %c0_7 = arith.constant 0 : index
    %c0_8 = arith.constant 0 : index
    %c0_9 = arith.constant 0 : index
    %24 = vector.load %arg4[%c0_7, %c0_8, %c0_9] : memref<1x256x8xf32, #tpu.memory_space<vmem>>, vector<1x256x8xf32>
    %25 = vector.shape_cast %24 : vector<1x256x8xf32> to vector<256x8xf32>
    %26 = vector.shape_cast %23 : vector<256x8xf32> to vector<1x256x8xf32>
    tpu.vector_store %arg4[%c0_7, %c0_8, %c0_9], %26 {strides = array<i32>} : memref<1x256x8xf32, #tpu.memory_space<vmem>>, vector<1x256x8xf32>,
    %cst_10 = arith.constant dense<0.000000e+00> : vector<8xf32>
    %27 = vector.multi_reduction <add>, %23, %cst_10 [0] : vector<256x8xf32> to vector<8xf32>
    %28 = vector.shape_cast %27 : vector<8xf32> to vector<1x8xf32>
    %29 = arith.mulf %23, %23 : vector<256x8xf32>
    %cst_11 = arith.constant dense<0.000000e+00> : vector<8xf32>
    %30 = vector.multi_reduction <add>, %29, %cst_11 [0] : vector<256x8xf32> to vector<8xf32>
    %31 = vector.shape_cast %30 : vector<8xf32> to vector<1x8xf32>
    %32 = tpu.concatenate %28, %31 in 0 : vector<1x8xf32>, vector<1x8xf32> -> vector<2x8xf32>
    %c0_12 = arith.constant 0 : index
    %c0_13 = arith.constant 0 : index
    %c0_14 = arith.constant 0 : index
    %33 = vector.load %arg5[%c0_12, %c0_13, %c0_14] : memref<1x2x8xf32, #tpu.memory_space<vmem>>, vector<1x2x8xf32>
    %34 = vector.shape_cast %33 : vector<1x2x8xf32> to vector<2x8xf32>
    %35 = vector.shape_cast %32 : vector<2x8xf32> to vector<1x2x8xf32>
    tpu.vector_store %arg5[%c0_12, %c0_13, %c0_14], %35 {strides = array<i32>} : memref<1x2x8xf32, #tpu.memory_space<vmem>>, vector<1x2x8xf32>,
    return
  }
  func.func @transform_0(%arg0: i32) -> (i32, i32, i32, i32) {
    %c0_i32 = arith.constant 0 : i32
    %c0_i32_0 = arith.constant 0 : i32
    %c0_i32_1 = arith.constant 0 : i32
    %c0_i32_2 = arith.constant 0 : i32
    return %arg0, %c0_i32, %c0_i32_0, %c0_i32_1 : i32, i32, i32, i32
  }
  func.func @transform_1(%arg0: i32) -> (i32, i32) {
    %c0_i32 = arith.constant 0 : i32
    %c0_i32_0 = arith.constant 0 : i32
    %c0_i32_1 = arith.constant 0 : i32
    return %c0_i32, %c0_i32_0 : i32, i32
  }
  func.func @transform_2(%arg0: i32) -> (i32, i32) {
    %c0_i32 = arith.constant 0 : i32
    %c0_i32_0 = arith.constant 0 : i32
    %c0_i32_1 = arith.constant 0 : i32
    return %c0_i32, %c0_i32_0 : i32, i32
  }
  func.func @transform_3(%arg0: i32) -> (i32, i32, i32) {
    %c0_i32 = arith.constant 0 : i32
    %c0_i32_0 = arith.constant 0 : i32
    %c0_i32_1 = arith.constant 0 : i32
    return %arg0, %c0_i32, %c0_i32_0 : i32, i32, i32
  }
  func.func @transform_4(%arg0: i32) -> (i32, i32, i32) {
    %c0_i32 = arith.constant 0 : i32
    %c0_i32_0 = arith.constant 0 : i32
    %c0_i32_1 = arith.constant 0 : i32
    return %arg0, %c0_i32, %c0_i32_0 : i32, i32, i32
  }
}

module attributes {stable_mosaic.version = 11 : i64} {
  func.func @_bn_relu_kernel(%arg0: i32, %arg1: memref<1x256x8xf32, #tpu.memory_space<vmem>>, %arg2: memref<1x8xf32, #tpu.memory_space<vmem>>, %arg3: memref<1x8xf32, #tpu.memory_space<vmem>>, %arg4: memref<1x256x8xf32, #tpu.memory_space<vmem>>) attributes {dimension_semantics = [#tpu.dimension_semantics<parallel>], iteration_bounds = array<i64: 2>, scalar_prefetch = 0 : i64, scratch_operands = 0 : i64, tpu.core_type = #tpu.core_type<tc>, window_params = [{transform_indices = @transform_0, window_bounds = array<i64: 1, 256, 8>}, {pipeline_mode = #tpu.pipeline_mode<synchronous>, transform_indices = @transform_1, window_bounds = array<i64: 1, 8>}, {pipeline_mode = #tpu.pipeline_mode<synchronous>, transform_indices = @transform_2, window_bounds = array<i64: 1, 8>}, {transform_indices = @transform_3, window_bounds = array<i64: 1, 256, 8>}]} {
    %c0 = arith.constant 0 : index
    %c0_0 = arith.constant 0 : index
    %c0_1 = arith.constant 0 : index
    %0 = vector.load %arg1[%c0, %c0_0, %c0_1] : memref<1x256x8xf32, #tpu.memory_space<vmem>>, vector<1x256x8xf32>
    %1 = vector.shape_cast %0 : vector<1x256x8xf32> to vector<256x8xf32>
    %c0_2 = arith.constant 0 : index
    %c0_3 = arith.constant 0 : index
    %2 = vector.load %arg2[%c0_2, %c0_3] : memref<1x8xf32, #tpu.memory_space<vmem>>, vector<1x8xf32>
    %3 = vector.broadcast %2 : vector<1x8xf32> to vector<256x8xf32>
    %4 = arith.mulf %1, %3 : vector<256x8xf32>
    %c0_4 = arith.constant 0 : index
    %c0_5 = arith.constant 0 : index
    %5 = vector.load %arg3[%c0_4, %c0_5] : memref<1x8xf32, #tpu.memory_space<vmem>>, vector<1x8xf32>
    %6 = vector.broadcast %5 : vector<1x8xf32> to vector<256x8xf32>
    %7 = arith.addf %4, %6 : vector<256x8xf32>
    %cst = arith.constant 0.000000e+00 : f32
    %8 = vector.broadcast %cst : f32 to vector<256x8xf32>
    %9 = arith.maximumf %7, %8 : vector<256x8xf32>
    %c0_6 = arith.constant 0 : index
    %c0_7 = arith.constant 0 : index
    %c0_8 = arith.constant 0 : index
    %10 = vector.load %arg4[%c0_6, %c0_7, %c0_8] : memref<1x256x8xf32, #tpu.memory_space<vmem>>, vector<1x256x8xf32>
    %11 = vector.shape_cast %10 : vector<1x256x8xf32> to vector<256x8xf32>
    %12 = vector.shape_cast %9 : vector<256x8xf32> to vector<1x256x8xf32>
    tpu.vector_store %arg4[%c0_6, %c0_7, %c0_8], %12 {strides = array<i32>} : memref<1x256x8xf32, #tpu.memory_space<vmem>>, vector<1x256x8xf32>,
    return
  }
  func.func @transform_0(%arg0: i32) -> (i32, i32, i32) {
    %c0_i32 = arith.constant 0 : i32
    %c0_i32_0 = arith.constant 0 : i32
    %c0_i32_1 = arith.constant 0 : i32
    return %arg0, %c0_i32, %c0_i32_0 : i32, i32, i32
  }
  func.func @transform_1(%arg0: i32) -> (i32, i32) {
    %c0_i32 = arith.constant 0 : i32
    %c0_i32_0 = arith.constant 0 : i32
    %c0_i32_1 = arith.constant 0 : i32
    return %c0_i32, %c0_i32_0 : i32, i32
  }
  func.func @transform_2(%arg0: i32) -> (i32, i32) {
    %c0_i32 = arith.constant 0 : i32
    %c0_i32_0 = arith.constant 0 : i32
    %c0_i32_1 = arith.constant 0 : i32
    return %c0_i32, %c0_i32_0 : i32, i32
  }
  func.func @transform_3(%arg0: i32) -> (i32, i32, i32) {
    %c0_i32 = arith.constant 0 : i32
    %c0_i32_0 = arith.constant 0 : i32
    %c0_i32_1 = arith.constant 0 : i32
    return %arg0, %c0_i32, %c0_i32_0 : i32, i32, i32
  }
}

</mosaic_0001>

<llo_original>
// kernel: conv_block.3
$region0: #{conv_block.3}
  #allocation0 [shape = 'u32[]', space=smem, size = 0x4, offset = 0x4, fixed_abs, tag = 'smem constant byte address 0x4 - core index']
  #allocation1 [shape = 'u32[144,128]{1,0:T(1,128)}', space=vmem, size = 0x12000, scoped, tag = 'internal scratch']
  %s0 = inlined_call_operand.vmem [shape: f32[2,256,8], index: 0, kind: input, shape index: {}, may-alias: {0,3}]
  %s1 = inlined_call_operand.vmem [shape: f32[1,8], index: 1, kind: input, shape index: {}]
  %s2 = inlined_call_operand.vmem [shape: f32[1,8], index: 2, kind: input, shape index: {}]
  %s3 = inlined_call_operand.vmem [shape: f32[2,256,8], index: 3, kind: output, shape index: {}, may-alias: {0,3}]
  %s4 = sld [smem:[#allocation0]]
  $region45: #{conv_block.3} parent=0
    _
  %s6 = ssub.s32 1, %s4
  %s7 = scalar_select 0, %s6, %s4
  loop: start=0, step=1, limit=4
  $region2: #{conv_block.3} parent=0 // loop_pre_header
    _
  $region3: #{conv_block.3} parent=0 // loop_header
    %s9 = sphi 0, %s13
    %p10 = scmp.ge.s32.totalorder %s9, 4
    %s19 = sphi 0, %s21
    %s22 = sphi 0, %s19
    %s23 = sphi 0, %s22
    %s39 = sphi 0, %s23
    %s43 = sphi 0, %s43
    %s45 = sphi 0, %s43
    %s46 = sphi 0, %s45
    %s60 = sphi 0, %s46
    %s64 = sphi 0, %s64
    %s66 = sphi 0, %s64
    %s67 = sphi 0, %s66
    %s81 = sphi 0, %s67
    %s87 = sphi 0, %s89
    %s90 = sphi 0, %s87
    %s91 = sphi 0, %s90
    %s107 = sphi 0, %s91
  $region4: #{conv_block.3} parent=0 // loop_header_branch
    %12 = sbr.rel (%p10) target = $region8
  $region5: #{conv_block.3} parent=0 // loop_body
    %s14 = ssub.s32 %s9, 1
    %s15 = ssub.s32 %s9, 2
    %s16 = sadd.s32 %s9, 1
    %s17 = ssub.s32 %s9, %s16
    %p18 = scmp.eq.s32.totalorder %s17, 0
    %s20 = sadd.s32 %s19, 1
    %s21 = scalar_select %p18, %s19, %s20
    %p24 = pneg %p18
    %p25 = scmp.eq.s32.totalorder %s9, 1
    %p26 = por %p24, %p25
    %p27 = scmp.ne.s32.totalorder %s19, %s22
    %p28 = scmp.eq.s32.totalorder %s9, 0
    %p29 = por %p27, %p28
    %p30 = scmp.ne.s32.totalorder %s19, %s22
    %p31 = scmp.eq.s32.totalorder %s14, 1
    %p32 = por %p30, %p31
    %p33 = scmp.ne.s32.totalorder %s22, %s23
    %p34 = scmp.eq.s32.totalorder %s14, 0
    %p35 = por %p33, %p34
    %p36 = scmp.ne.s32.totalorder %s22, %s23
    %p37 = scmp.eq.s32.totalorder %s15, 1
    %p38 = por %p36, %p37
    %p40 = scmp.ne.s32.totalorder %s23, %s39
    %p41 = scmp.eq.s32.totalorder %s15, 0
    %p42 = por %p40, %p41
    %s44 = sadd.s32 %s43, 1
    %p47 = scmp.eq.s32.totalorder %s9, 1
    %p48 = scmp.ne.s32.totalorder %s43, %s45
    %p49 = scmp.eq.s32.totalorder %s9, 0
    %p50 = por %p48, %p49
    %p51 = scmp.ne.s32.totalorder %s43, %s45
    %p52 = scmp.eq.s32.totalorder %s14, 1
    %p53 = por %p51, %p52
    %p54 = scmp.ne.s32.totalorder %s45, %s46
    %p55 = scmp.eq.s32.totalorder %s14, 0
    %p56 = por %p54, %p55
    %p57 = scmp.ne.s32.totalorder %s45, %s46
    %p58 = scmp.eq.s32.totalorder %s15, 1
    %p59 = por %p57, %p58
    %p61 = scmp.ne.s32.totalorder %s46, %s60
    %p62 = scmp.eq.s32.totalorder %s15, 0
    %p63 = por %p61, %p62
    %s65 = sadd.s32 %s64, 1
    %p68 = scmp.eq.s32.totalorder %s9, 1
    %p69 = scmp.ne.s32.totalorder %s64, %s66
    %p70 = scmp.eq.s32.totalorder %s9, 0
    %p71 = por %p69, %p70
    %p72 = scmp.ne.s32.totalorder %s64, %s66
    %p73 = scmp.eq.s32.totalorder %s14, 1
    %p74 = por %p72, %p73
    %p75 = scmp.ne.s32.totalorder %s66, %s67
    %p76 = scmp.eq.s32.totalorder %s14, 0
    %p77 = por %p75, %p76
    %p78 = scmp.ne.s32.totalorder %s66, %s67
    %p79 = scmp.eq.s32.totalorder %s15, 1
    %p80 = por %p78, %p79
    %p82 = scmp.ne.s32.totalorder %s67, %s81
    %p83 = scmp.eq.s32.totalorder %s15, 0
    %p84 = por %p82, %p83
    %s85 = ssub.s32 %s9, %s16
    %p86 = scmp.eq.s32.totalorder %s85, 0
    %s88 = sadd.s32 %s87, 1
    %s89 = scalar_select %p86, %s87, %s88
    %p92 = pneg %p86
    %p93 = scmp.eq.s32.totalorder %s9, 1
    %p94 = por %p92, %p93
    %p95 = scmp.ne.s32.totalorder %s87, %s90
    %p96 = scmp.eq.s32.totalorder %s9, 0
    %p97 = por %p95, %p96
    %p98 = scmp.ne.s32.totalorder %s87, %s90
    %p99 = scmp.eq.s32.totalorder %s14, 1
    %p100 = por %p98, %p99
    %p101 = scmp.ne.s32.totalorder %s90, %s91
    %p102 = scmp.eq.s32.totalorder %s14, 0
    %p103 = por %p101, %p102
    %p104 = scmp.ne.s32.totalorder %s90, %s91
    %p105 = scmp.eq.s32.totalorder %s15, 1
    %p106 = por %p104, %p105
    %p108 = scmp.ne.s32.totalorder %s91, %s107
    %p109 = scmp.eq.s32.totalorder %s15, 0
    %p110 = por %p108, %p109
    %p111 = scmp.le.s32.totalorder 1, %s9
    %p112 = scmp.lt.s32.totalorder %s9, 3
    %p113 = pnand %p111, %p112
    %p114 = pneg %p113
    // Predicated region
    $region9: #{conv_block.3} parent=5 // pred_check
      _
    $region10: #{conv_block.3} parent=5 // pred_check_branch
      %116 = sbr.rel (%p113) target = $region12
    $region11: #{conv_block.3} parent=5 // pred_region
      %s117 = ssub.s32 %s9, 1
      // Predicated region
      $region13: #{conv_block.3} parent=11 // pred_check
        %p118 = pneg %p56
      $region14: #{conv_block.3} parent=11 // pred_check_branch
        %120 = sbr.rel (%p118) target = $region16
      $region15: #{conv_block.3} parent=11 // pred_region
        _
      $region16: #{conv_block.3} parent=11 // pred_fallthru
        _
      // Predicated region
      $region17: #{conv_block.3} parent=11 // pred_check
        %p121 = pneg %p77
      $region18: #{conv_block.3} parent=11 // pred_check_branch
        %123 = sbr.rel (%p121) target = $region20
      $region19: #{conv_block.3} parent=11 // pred_region
        _
      $region20: #{conv_block.3} parent=11 // pred_fallthru
        _
    $region12: #{conv_block.3} parent=5 // pred_fallthru
      _
    %p124 = scmp.lt.s32.totalorder %s9, 2
    // Predicated region
    $region21: #{conv_block.3} parent=5 // pred_check
      %p125 = pneg %p124
    $region22: #{conv_block.3} parent=5 // pred_check_branch
      %127 = sbr.rel (%p125) target = $region24
    $region23: #{conv_block.3} parent=5 // pred_region
      // Predicated region
      $region25: #{conv_block.3} parent=23 // pred_check
        %p128 = pneg %p29
      $region26: #{conv_block.3} parent=23 // pred_check_branch
        %130 = sbr.rel (%p128) target = $region28
      $region27: #{conv_block.3} parent=23 // pred_region
        %p131 = scmp.lt.s32.totalorder %s9, 1
        %s132 = scalar_select %p131, %s9, 1
        %s133 = smul.addr %s132, 32
        %s134 = smul.addr %s133, 8
        %s135 = scalar_lea.vmem %s0, %s134
      $region28: #{conv_block.3} parent=23 // pred_fallthru
        _
    $region24: #{conv_block.3} parent=5 // pred_fallthru
      _
    %p136 = scmp.le.s32.totalorder 1, %s9
    %p137 = scmp.lt.s32.totalorder %s9, 3
    %p138 = pnand %p136, %p137
    %p139 = pneg %p138
    // Predicated region
    $region29: #{conv_block.3} parent=5 // pred_check
      _
    $region30: #{conv_block.3} parent=5 // pred_check_branch
      %141 = sbr.rel (%p138) target = $region32
    $region31: #{conv_block.3} parent=5 // pred_region
      %s142 = ssub.s32 %s9, 1
      %p143 = scmp.lt.s32.totalorder %s14, 1
      %s144 = scalar_select %p143, %s14, 1
      %s145 = smul.addr %s144, 32
      %s146 = smul.addr %s145, 8
      %s147 = scalar_lea.vmem %s0, %s146
      %p148 = pneg %p35
      %p149 = pneg %p32
      %p150 = pneg %p56
      %p151 = pneg %p53
      %p152 = pneg %p77
      %p153 = pneg %p74
      %p154 = pneg %p103
      %p155 = pneg %p100
      %p156 = scmp.lt.s32.totalorder %s14, 1
      %s157 = scalar_select %p156, %s14, 1
      %s158 = smul.addr %s157, 32
      %s159 = smul.addr %s158, 8
      %s160 = scalar_lea.vmem %s3, %s159
      %p161 = scmp.lt.s32.totalorder %s14, 1
      %s162 = scalar_select %p161, %s14, 1
      %s163 = smul.addr %s162, 32
      %s164 = smul.addr %s163, 8
      %s165 = scalar_lea.vmem %s0, %s164
      %p166 = scmp.lt.s32.totalorder %s14, 1
      %s167 = scalar_select %p166, %s14, 1
      %s168 = smul.addr %s167, 32
      %s169 = smul.addr %s168, 8
      %s170 = scalar_lea.vmem %s3, %s169
      %v171 = vld [vmem:[%s165] sm:$0xff]
      %v172 = vld [vmem:[%s165 + $0x8] sm:$0xff]
      %v173 = vld [vmem:[%s165 + $0x10] sm:$0xff]
      %v174 = vld [vmem:[%s165 + $0x18] sm:$0xff]
      %v175 = vld [vmem:[%s165 + $0x20] sm:$0xff]
      %v176 = vld [vmem:[%s165 + $0x28] sm:$0xff]
      %v177 = vld [vmem:[%s165 + $0x30] sm:$0xff]
      %v178 = vld [vmem:[%s165 + $0x38] sm:$0xff]
      %v179 = vld [vmem:[%s165 + $0x40] sm:$0xff]
      %v180 = vld [vmem:[%s165 + $0x48] sm:$0xff]
      %v181 = vld [vmem:[%s165 + $0x50] sm:$0xff]
      %v182 = vld [vmem:[%s165 + $0x58] sm:$0xff]
      %v183 = vld [vmem:[%s165 + $0x60] sm:$0xff]
      %v184 = vld [vmem:[%s165 + $0x68] sm:$0xff]
      %v185 = vld [vmem:[%s165 + $0x70] sm:$0xff]
      %v186 = vld [vmem:[%s165 + $0x78] sm:$0xff]
      %v187 = vld [vmem:[%s165 + $0x80] sm:$0xff]
      %v188 = vld [vmem:[%s165 + $0x88] sm:$0xff]
      %v189 = vld [vmem:[%s165 + $0x90] sm:$0xff]
      %v190 = vld [vmem:[%s165 + $0x98] sm:$0xff]
      %v191 = vld [vmem:[%s165 + $0xa0] sm:$0xff]
      %v192 = vld [vmem:[%s165 + $0xa8] sm:$0xff]
      %v193 = vld [vmem:[%s165 + $0xb0] sm:$0xff]
      %v194 = vld [vmem:[%s165 + $0xb8] sm:$0xff]
      %v195 = vld [vmem:[%s165 + $0xc0] sm:$0xff]
      %v196 = vld [vmem:[%s165 + $0xc8] sm:$0xff]
      %v197 = vld [vmem:[%s165 + $0xd0] sm:$0xff]
      %v198 = vld [vmem:[%s165 + $0xd8] sm:$0xff]
      %v199 = vld [vmem:[%s165 + $0xe0] sm:$0xff]
      %v200 = vld [vmem:[%s165 + $0xe8] sm:$0xff]
      %v201 = vld [vmem:[%s165 + $0xf0] sm:$0xff]
      %v202 = vld [vmem:[%s165 + $0xf8] sm:$0xff]
      %v203 = vld [vmem:[%s1] sm:$0x1]
      %v205 = vlaneseq
      %v206 = vshrl.u32 %v205, 7
      %v207 = vsub.s32 0, %v206
      %v208 = vrot.slane %v203, %v207
      %v210 = vmul.f32 %v171, %v208
      %v211 = vmul.f32 %v172, %v208
      %v212 = vmul.f32 %v173, %v208
      %v213 = vmul.f32 %v174, %v208
      %v214 = vmul.f32 %v175, %v208
      %v215 = vmul.f32 %v176, %v208
      %v216 = vmul.f32 %v177, %v208
      %v217 = vmul.f32 %v178, %v208
      %v218 = vmul.f32 %v179, %v208
      %v219 = vmul.f32 %v180, %v208
      %v220 = vmul.f32 %v181, %v208
      %v221 = vmul.f32 %v182, %v208
      %v222 = vmul.f32 %v183, %v208
      %v223 = vmul.f32 %v184, %v208
      %v224 = vmul.f32 %v185, %v208
      %v225 = vmul.f32 %v186, %v208
      %v226 = vmul.f32 %v187, %v208
      %v227 = vmul.f32 %v188, %v208
      %v228 = vmul.f32 %v189, %v208
      %v229 = vmul.f32 %v190, %v208
      %v230 = vmul.f32 %v191, %v208
      %v231 = vmul.f32 %v192, %v208
      %v232 = vmul.f32 %v193, %v208
      %v233 = vmul.f32 %v194, %v208
      %v234 = vmul.f32 %v195, %v208
      %v235 = vmul.f32 %v196, %v208
      %v236 = vmul.f32 %v197, %v208
      %v237 = vmul.f32 %v198, %v208
      %v238 = vmul.f32 %v199, %v208
      %v239 = vmul.f32 %v200, %v208
      %v240 = vmul.f32 %v201, %v208
      %v241 = vmul.f32 %v202, %v208
      %v242 = vld [vmem:[%s2] sm:$0x1]
      %v244 = vlaneseq
      %v245 = vshrl.u32 %v244, 7
      %v246 = vsub.s32 0, %v245
      %v247 = vrot.slane %v242, %v246
      %v249 = vadd.f32 %v210, %v247
      %v250 = vadd.f32 %v211, %v247
      %v251 = vadd.f32 %v212, %v247
      %v252 = vadd.f32 %v213, %v247
      %v253 = vadd.f32 %v214, %v247
      %v254 = vadd.f32 %v215, %v247
      %v255 = vadd.f32 %v216, %v247
      %v256 = vadd.f32 %v217, %v247
      %v257 = vadd.f32 %v218, %v247
      %v258 = vadd.f32 %v219, %v247
      %v259 = vadd.f32 %v220, %v247
      %v260 = vadd.f32 %v221, %v247
      %v261 = vadd.f32 %v222, %v247
      %v262 = vadd.f32 %v223, %v247
      %v263 = vadd.f32 %v224, %v247
      %v264 = vadd.f32 %v225, %v247
      %v265 = vadd.f32 %v226, %v247
      %v266 = vadd.f32 %v227, %v247
      %v267 = vadd.f32 %v228, %v247
      %v268 = vadd.f32 %v229, %v247
      %v269 = vadd.f32 %v230, %v247
      %v270 = vadd.f32 %v231, %v247
      %v271 = vadd.f32 %v232, %v247
      %v272 = vadd.f32 %v233, %v247
      %v273 = vadd.f32 %v234, %v247
      %v274 = vadd.f32 %v235, %v247
      %v275 = vadd.f32 %v236, %v247
      %v276 = vadd.f32 %v237, %v247
      %v277 = vadd.f32 %v238, %v247
      %v278 = vadd.f32 %v239, %v247
      %v279 = vadd.f32 %v240, %v247
      %v280 = vadd.f32 %v241, %v247
      %v281 = vmax.f32 %v249, 0.0
      %v282 = vmax.f32 %v250, 0.0
      %v283 = vmax.f32 %v251, 0.0
      %v284 = vmax.f32 %v252, 0.0
      %v285 = vmax.f32 %v253, 0.0
      %v286 = vmax.f32 %v254, 0.0
      %v287 = vmax.f32 %v255, 0.0
      %v288 = vmax.f32 %v256, 0.0
      %v289 = vmax.f32 %v257, 0.0
      %v290 = vmax.f32 %v258, 0.0
      %v291 = vmax.f32 %v259, 0.0
      %v292 = vmax.f32 %v260, 0.0
      %v293 = vmax.f32 %v261, 0.0
      %v294 = vmax.f32 %v262, 0.0
      %v295 = vmax.f32 %v263, 0.0
      %v296 = vmax.f32 %v264, 0.0
      %v297 = vmax.f32 %v265, 0.0
      %v298 = vmax.f32 %v266, 0.0
      %v299 = vmax.f32 %v267, 0.0
      %v300 = vmax.f32 %v268, 0.0
      %v301 = vmax.f32 %v269, 0.0
      %v302 = vmax.f32 %v270, 0.0
      %v303 = vmax.f32 %v271, 0.0
      %v304 = vmax.f32 %v272, 0.0
      %v305 = vmax.f32 %v273, 0.0
      %v306 = vmax.f32 %v274, 0.0
      %v307 = vmax.f32 %v275, 0.0
      %v308 = vmax.f32 %v276, 0.0
      %v309 = vmax.f32 %v277, 0.0
      %v310 = vmax.f32 %v278, 0.0
      %v311 = vmax.f32 %v279, 0.0
      %v312 = vmax.f32 %v280, 0.0
      %vm313 = vcmask 64512
      %314 = vst.msk [vmem:[%s170] sm:$0xff] %vm313, %v281
      %315 = vst.msk [vmem:[%s170 + $0x8] sm:$0xff] %vm313, %v282
      %316 = vst.msk [vmem:[%s170 + $0x10] sm:$0xff] %vm313, %v283
      %317 = vst.msk [vmem:[%s170 + $0x18] sm:$0xff] %vm313, %v284
      %318 = vst.msk [vmem:[%s170 + $0x20] sm:$0xff] %vm313, %v285
      %319 = vst.msk [vmem:[%s170 + $0x28] sm:$0xff] %vm313, %v286
      %320 = vst.msk [vmem:[%s170 + $0x30] sm:$0xff] %vm313, %v287
      %321 = vst.msk [vmem:[%s170 + $0x38] sm:$0xff] %vm313, %v288
      %322 = vst.msk [vmem:[%s170 + $0x40] sm:$0xff] %vm313, %v289
      %323 = vst.msk [vmem:[%s170 + $0x48] sm:$0xff] %vm313, %v290
      %324 = vst.msk [vmem:[%s170 + $0x50] sm:$0xff] %vm313, %v291
      %325 = vst.msk [vmem:[%s170 + $0x58] sm:$0xff] %vm313, %v292
      %326 = vst.msk [vmem:[%s170 + $0x60] sm:$0xff] %vm313, %v293
      %327 = vst.msk [vmem:[%s170 + $0x68] sm:$0xff] %vm313, %v294
      %328 = vst.msk [vmem:[%s170 + $0x70] sm:$0xff] %vm313, %v295
      %329 = vst.msk [vmem:[%s170 + $0x78] sm:$0xff] %vm313, %v296
      %330 = vst.msk [vmem:[%s170 + $0x80] sm:$0xff] %vm313, %v297
      %331 = vst.msk [vmem:[%s170 + $0x88] sm:$0xff] %vm313, %v298
      %332 = vst.msk [vmem:[%s170 + $0x90] sm:$0xff] %vm313, %v299
      %333 = vst.msk [vmem:[%s170 + $0x98] sm:$0xff] %vm313, %v300
      %334 = vst.msk [vmem:[%s170 + $0xa0] sm:$0xff] %vm313, %v301
      %335 = vst.msk [vmem:[%s170 + $0xa8] sm:$0xff] %vm313, %v302
      %336 = vst.msk [vmem:[%s170 + $0xb0] sm:$0xff] %vm313, %v303
      %337 = vst.msk [vmem:[%s170 + $0xb8] sm:$0xff] %vm313, %v304
      %338 = vst.msk [vmem:[%s170 + $0xc0] sm:$0xff] %vm313, %v305
      %339 = vst.msk [vmem:[%s170 + $0xc8] sm:$0xff] %vm313, %v306
      %340 = vst.msk [vmem:[%s170 + $0xd0] sm:$0xff] %vm313, %v307
      %341 = vst.msk [vmem:[%s170 + $0xd8] sm:$0xff] %vm313, %v308
      %342 = vst.msk [vmem:[%s170 + $0xe0] sm:$0xff] %vm313, %v309
      %343 = vst.msk [vmem:[%s170 + $0xe8] sm:$0xff] %vm313, %v310
      %344 = vst.msk [vmem:[%s170 + $0xf0] sm:$0xff] %vm313, %v311
      %345 = vst.msk [vmem:[%s170 + $0xf8] sm:$0xff] %vm313, %v312
      %p346 = scmp.lt.s32.totalorder %s14, 1
      %s347 = scalar_select %p346, %s14, 1
      %s348 = smul.addr %s347, 32
      %s349 = smul.addr %s348, 8
      %s350 = scalar_lea.vmem %s3, %s349
      // Predicated region
      $region33: #{conv_block.3} parent=31 // pred_check
        %p351 = pneg %p100
      $region34: #{conv_block.3} parent=31 // pred_check_branch
        %353 = sbr.rel (%p351) target = $region36
      $region35: #{conv_block.3} parent=31 // pred_region
        _
      $region36: #{conv_block.3} parent=31 // pred_fallthru
        _
    $region32: #{conv_block.3} parent=5 // pred_fallthru
      _
    %p354 = scmp.le.s32.totalorder 2, %s9
    // Predicated region
    $region37: #{conv_block.3} parent=5 // pred_check
      %p355 = pneg %p354
    $region38: #{conv_block.3} parent=5 // pred_check_branch
      %357 = sbr.rel (%p355) target = $region40
    $region39: #{conv_block.3} parent=5 // pred_region
      %s358 = ssub.s32 %s9, 2
      // Predicated region
      $region41: #{conv_block.3} parent=39 // pred_check
        %p359 = pneg %p106
      $region42: #{conv_block.3} parent=39 // pred_check_branch
        %361 = sbr.rel (%p359) target = $region44
      $region43: #{conv_block.3} parent=39 // pred_region
        %p362 = scmp.lt.s32.totalorder %s15, 1
        %s363 = scalar_select %p362, %s15, 1
        %s364 = smul.addr %s363, 32
        %s365 = smul.addr %s364, 8
        %s366 = scalar_lea.vmem %s3, %s365
      $region44: #{conv_block.3} parent=39 // pred_fallthru
        _
    $region40: #{conv_block.3} parent=5 // pred_fallthru
      _
  $region6: #{conv_block.3} parent=0 // loop_footer
    %s13 = sadd.s32 1, %s9
  $region7: #{conv_block.3} parent=0 // loop_footer_branch
    %8 = sbr.rel target = $region3
  $region8: #{conv_block.3} parent=0 // loop_exit
    _

// kernel: conv_block.2
$region0: #{conv_block.2}
  #allocation0 [shape = 'u32[]', space=smem, size = 0x4, offset = 0x4, fixed_abs, tag = 'smem constant byte address 0x4 - core index']
  #allocation1 [shape = 'u32[144,128]{1,0:T(1,128)}', space=vmem, size = 0x12000, scoped, tag = 'internal scratch']
  %s0 = inlined_call_operand.vmem [shape: f32[2,16,16,4], index: 0, kind: input, shape index: {}]
  %s1 = inlined_call_operand.vmem [shape: f32[36,8], index: 1, kind: input, shape index: {}]
  %s2 = inlined_call_operand.vmem [shape: f32[1,8], index: 2, kind: input, shape index: {}]
  %s3 = inlined_call_operand.vmem [shape: f32[2,256,8], index: 3, kind: output, shape index: {0}]
  %s4 = inlined_call_operand.vmem [shape: f32[2,2,8], index: 4, kind: output, shape index: {1}]
  %5 = xla_tuple %s3, %s4
  %s6 = sld [smem:[#allocation0]]
  $region53: #{conv_block.2} parent=0
    _
  %s8 = ssub.s32 1, %s6
  %s9 = scalar_select 0, %s8, %s6
  loop: start=0, step=1, limit=4
  $region2: #{conv_block.2} parent=0 // loop_pre_header
    _
  $region3: #{conv_block.2} parent=0 // loop_header
    %s11 = sphi 0, %s15
    %p12 = scmp.ge.s32.totalorder %s11, 4
    %s21 = sphi 0, %s23
    %s24 = sphi 0, %s21
    %s25 = sphi 0, %s24
    %s41 = sphi 0, %s25
    %s45 = sphi 0, %s45
    %s47 = sphi 0, %s45
    %s48 = sphi 0, %s47
    %s62 = sphi 0, %s48
    %s66 = sphi 0, %s66
    %s68 = sphi 0, %s66
    %s69 = sphi 0, %s68
    %s83 = sphi 0, %s69
    %s89 = sphi 0, %s91
    %s92 = sphi 0, %s89
    %s93 = sphi 0, %s92
    %s109 = sphi 0, %s93
    %s115 = sphi 0, %s117
    %s118 = sphi 0, %s115
    %s119 = sphi 0, %s118
    %s135 = sphi 0, %s119
  $region4: #{conv_block.2} parent=0 // loop_header_branch
    %14 = sbr.rel (%p12) target = $region8
  $region5: #{conv_block.2} parent=0 // loop_body
    %s16 = ssub.s32 %s11, 1
    %s17 = ssub.s32 %s11, 2
    %s18 = sadd.s32 %s11, 1
    %s19 = ssub.s32 %s11, %s18
    %p20 = scmp.eq.s32.totalorder %s19, 0
    %s22 = sadd.s32 %s21, 1
    %s23 = scalar_select %p20, %s21, %s22
    %p26 = pneg %p20
    %p27 = scmp.eq.s32.totalorder %s11, 1
    %p28 = por %p26, %p27
    %p29 = scmp.ne.s32.totalorder %s21, %s24
    %p30 = scmp.eq.s32.totalorder %s11, 0
    %p31 = por %p29, %p30
    %p32 = scmp.ne.s32.totalorder %s21, %s24
    %p33 = scmp.eq.s32.totalorder %s16, 1
    %p34 = por %p32, %p33
    %p35 = scmp.ne.s32.totalorder %s24, %s25
    %p36 = scmp.eq.s32.totalorder %s16, 0
    %p37 = por %p35, %p36
    %p38 = scmp.ne.s32.totalorder %s24, %s25
    %p39 = scmp.eq.s32.totalorder %s17, 1
    %p40 = por %p38, %p39
    %p42 = scmp.ne.s32.totalorder %s25, %s41
    %p43 = scmp.eq.s32.totalorder %s17, 0
    %p44 = por %p42, %p43
    %s46 = sadd.s32 %s45, 1
    %p49 = scmp.eq.s32.totalorder %s11, 1
    %p50 = scmp.ne.s32.totalorder %s45, %s47
    %p51 = scmp.eq.s32.totalorder %s11, 0
    %p52 = por %p50, %p51
    %p53 = scmp.ne.s32.totalorder %s45, %s47
    %p54 = scmp.eq.s32.totalorder %s16, 1
    %p55 = por %p53, %p54
    %p56 = scmp.ne.s32.totalorder %s47, %s48
    %p57 = scmp.eq.s32.totalorder %s16, 0
    %p58 = por %p56, %p57
    %p59 = scmp.ne.s32.totalorder %s47, %s48
    %p60 = scmp.eq.s32.totalorder %s17, 1
    %p61 = por %p59, %p60
    %p63 = scmp.ne.s32.totalorder %s48, %s62
    %p64 = scmp.eq.s32.totalorder %s17, 0
    %p65 = por %p63, %p64
    %s67 = sadd.s32 %s66, 1
    %p70 = scmp.eq.s32.totalorder %s11, 1
    %p71 = scmp.ne.s32.totalorder %s66, %s68
    %p72 = scmp.eq.s32.totalorder %s11, 0
    %p73 = por %p71, %p72
    %p74 = scmp.ne.s32.totalorder %s66, %s68
    %p75 = scmp.eq.s32.totalorder %s16, 1
    %p76 = por %p74, %p75
    %p77 = scmp.ne.s32.totalorder %s68, %s69
    %p78 = scmp.eq.s32.totalorder %s16, 0
    %p79 = por %p77, %p78
    %p80 = scmp.ne.s32.totalorder %s68, %s69
    %p81 = scmp.eq.s32.totalorder %s17, 1
    %p82 = por %p80, %p81
    %p84 = scmp.ne.s32.totalorder %s69, %s83
    %p85 = scmp.eq.s32.totalorder %s17, 0
    %p86 = por %p84, %p85
    %s87 = ssub.s32 %s11, %s18
    %p88 = scmp.eq.s32.totalorder %s87, 0
    %s90 = sadd.s32 %s89, 1
    %s91 = scalar_select %p88, %s89, %s90
    %p94 = pneg %p88
    %p95 = scmp.eq.s32.totalorder %s11, 1
    %p96 = por %p94, %p95
    %p97 = scmp.ne.s32.totalorder %s89, %s92
    %p98 = scmp.eq.s32.totalorder %s11, 0
    %p99 = por %p97, %p98
    %p100 = scmp.ne.s32.totalorder %s89, %s92
    %p101 = scmp.eq.s32.totalorder %s16, 1
    %p102 = por %p100, %p101
    %p103 = scmp.ne.s32.totalorder %s92, %s93
    %p104 = scmp.eq.s32.totalorder %s16, 0
    %p105 = por %p103, %p104
    %p106 = scmp.ne.s32.totalorder %s92, %s93
    %p107 = scmp.eq.s32.totalorder %s17, 1
    %p108 = por %p106, %p107
    %p110 = scmp.ne.s32.totalorder %s93, %s109
    %p111 = scmp.eq.s32.totalorder %s17, 0
    %p112 = por %p110, %p111
    %s113 = ssub.s32 %s11, %s18
    %p114 = scmp.eq.s32.totalorder %s113, 0
    %s116 = sadd.s32 %s115, 1
    %s117 = scalar_select %p114, %s115, %s116
    %p120 = pneg %p114
    %p121 = scmp.eq.s32.totalorder %s11, 1
    %p122 = por %p120, %p121
    %p123 = scmp.ne.s32.totalorder %s115, %s118
    %p124 = scmp.eq.s32.totalorder %s11, 0
    %p125 = por %p123, %p124
    %p126 = scmp.ne.s32.totalorder %s115, %s118
    %p127 = scmp.eq.s32.totalorder %s16, 1
    %p128 = por %p126, %p127
    %p129 = scmp.ne.s32.totalorder %s118, %s119
    %p130 = scmp.eq.s32.totalorder %s16, 0
    %p131 = por %p129, %p130
    %p132 = scmp.ne.s32.totalorder %s118, %s119
    %p133 = scmp.eq.s32.totalorder %s17, 1
    %p134 = por %p132, %p133
    %p136 = scmp.ne.s32.totalorder %s119, %s135
    %p137 = scmp.eq.s32.totalorder %s17, 0
    %p138 = por %p136, %p137
    %p139 = scmp.le.s32.totalorder 1, %s11
    %p140 = scmp.lt.s32.totalorder %s11, 3
    %p141 = pnand %p139, %p140
    %p142 = pneg %p141
    // Predicated region
    $region9: #{conv_block.2} parent=5 // pred_check
      _
    $region10: #{conv_block.2} parent=5 // pred_check_branch
      %144 = sbr.rel (%p141) target = $region12
    $region11: #{conv_block.2} parent=5 // pred_region
      %s145 = ssub.s32 %s11, 1
      // Predicated region
      $region13: #{conv_block.2} parent=11 // pred_check
        %p146 = pneg %p58
      $region14: #{conv_block.2} parent=11 // pred_check_branch
        %148 = sbr.rel (%p146) target = $region16
      $region15: #{conv_block.2} parent=11 // pred_region
        _
      $region16: #{conv_block.2} parent=11 // pred_fallthru
        _
      // Predicated region
      $region17: #{conv_block.2} parent=11 // pred_check
        %p149 = pneg %p79
      $region18: #{conv_block.2} parent=11 // pred_check_branch
        %151 = sbr.rel (%p149) target = $region20
      $region19: #{conv_block.2} parent=11 // pred_region
        _
      $region20: #{conv_block.2} parent=11 // pred_fallthru
        _
    $region12: #{conv_block.2} parent=5 // pred_fallthru
      _
    %p152 = scmp.lt.s32.totalorder %s11, 2
    // Predicated region
    $region21: #{conv_block.2} parent=5 // pred_check
      %p153 = pneg %p152
    $region22: #{conv_block.2} parent=5 // pred_check_branch
      %155 = sbr.rel (%p153) target = $region24
    $region23: #{conv_block.2} parent=5 // pred_region
      // Predicated region
      $region25: #{conv_block.2} parent=23 // pred_check
        %p156 = pneg %p31
      $region26: #{conv_block.2} parent=23 // pred_check_branch
        %158 = sbr.rel (%p156) target = $region28
      $region27: #{conv_block.2} parent=23 // pred_region
        %p159 = scmp.lt.s32.totalorder %s11, 1
        %s160 = scalar_select %p159, %s11, 1
        %s161 = smul.addr %s160, 32
        %s162 = smul.addr %s161, 8
        %s163 = scalar_lea.vmem %s0, %s162
      $region28: #{conv_block.2} parent=23 // pred_fallthru
        _
    $region24: #{conv_block.2} parent=5 // pred_fallthru
      _
    %p164 = scmp.le.s32.totalorder 1, %s11
    %p165 = scmp.lt.s32.totalorder %s11, 3
    %p166 = pnand %p164, %p165
    %p167 = pneg %p166
    // Predicated region
    $region29: #{conv_block.2} parent=5 // pred_check
      _
    $region30: #{conv_block.2} parent=5 // pred_check_branch
      %169 = sbr.rel (%p166) target = $region32
    $region31: #{conv_block.2} parent=5 // pred_region
      %s170 = ssub.s32 %s11, 1
      %p171 = scmp.lt.s32.totalorder %s16, 1
      %s172 = scalar_select %p171, %s16, 1
      %s173 = smul.addr %s172, 32
      %s174 = smul.addr %s173, 8
      %s175 = scalar_lea.vmem %s0, %s174
      %p176 = pneg %p37
      %p177 = pneg %p34
      %p178 = pneg %p58
      %p179 = pneg %p55
      %p180 = pneg %p79
      %p181 = pneg %p76
      %p182 = pneg %p105
      %p183 = pneg %p102
      %p184 = scmp.lt.s32.totalorder %s16, 1
      %s185 = scalar_select %p184, %s16, 1
      %s186 = smul.addr %s185, 32
      %s187 = smul.addr %s186, 8
      %s188 = scalar_lea.vmem %s3, %s187
      %p189 = pneg %p131
      %p190 = pneg %p128
      %p191 = scmp.lt.s32.totalorder %s16, 1
      %s192 = scalar_select %p191, %s16, 1
      %s193 = smul.addr %s192, 2
      %s194 = scalar_lea.vmem %s4, %s193
      %p195 = scmp.lt.s32.totalorder %s16, 1
      %s196 = scalar_select %p195, %s16, 1
      %s197 = smul.addr %s196, 32
      %s198 = smul.addr %s197, 8
      %s199 = scalar_lea.vmem %s0, %s198
      %p200 = scmp.lt.s32.totalorder %s16, 1
      %s201 = scalar_select %p200, %s16, 1
      %s202 = smul.addr %s201, 32
      %s203 = smul.addr %s202, 8
      %s204 = scalar_lea.vmem %s3, %s203
      %p205 = scmp.lt.s32.totalorder %s16, 1
      %s206 = scalar_select %p205, %s16, 1
      %s207 = smul.addr %s206, 2
      %s208 = scalar_lea.vmem %s4, %s207
      %v209 = vld [vmem:[%s199] sm:$0xff]
      %v210 = vld [vmem:[%s199 + $0x8] sm:$0xff]
      %v211 = vld [vmem:[%s199 + $0x10] sm:$0xff]
      %v212 = vld [vmem:[%s199 + $0x18] sm:$0xff]
      %v213 = vld [vmem:[%s199 + $0x20] sm:$0xff]
      %v214 = vld [vmem:[%s199 + $0x28] sm:$0xff]
      %v215 = vld [vmem:[%s199 + $0x30] sm:$0xff]
      %v216 = vld [vmem:[%s199 + $0x38] sm:$0xff]
      %v217 = vld [vmem:[%s199 + $0x40] sm:$0xff]
      %v218 = vld [vmem:[%s199 + $0x48] sm:$0xff]
      %v219 = vld [vmem:[%s199 + $0x50] sm:$0xff]
      %v220 = vld [vmem:[%s199 + $0x58] sm:$0xff]
      %v221 = vld [vmem:[%s199 + $0x60] sm:$0xff]
      %v222 = vld [vmem:[%s199 + $0x68] sm:$0xff]
      %v223 = vld [vmem:[%s199 + $0x70] sm:$0xff]
      %v224 = vld [vmem:[%s199 + $0x78] sm:$0xff]
      %v225 = vld [vmem:[%s199 + $0x80] sm:$0xff]
      %v226 = vld [vmem:[%s199 + $0x88] sm:$0xff]
      %v227 = vld [vmem:[%s199 + $0x90] sm:$0xff]
      %v228 = vld [vmem:[%s199 + $0x98] sm:$0xff]
      %v229 = vld [vmem:[%s199 + $0xa0] sm:$0xff]
      %v230 = vld [vmem:[%s199 + $0xa8] sm:$0xff]
      %v231 = vld [vmem:[%s199 + $0xb0] sm:$0xff]
      %v232 = vld [vmem:[%s199 + $0xb8] sm:$0xff]
      %v233 = vld [vmem:[%s199 + $0xc0] sm:$0xff]
      %v234 = vld [vmem:[%s199 + $0xc8] sm:$0xff]
      %v235 = vld [vmem:[%s199 + $0xd0] sm:$0xff]
      %v236 = vld [vmem:[%s199 + $0xd8] sm:$0xff]
      %v237 = vld [vmem:[%s199 + $0xe0] sm:$0xff]
      %v238 = vld [vmem:[%s199 + $0xe8] sm:$0xff]
      %v239 = vld [vmem:[%s199 + $0xf0] sm:$0xff]
      %v240 = vld [vmem:[%s199 + $0xf8] sm:$0xff]
      %v257 = vrot.slane %v211, 1
      %v258 = vrot.slane %v209, 1
      %v259 = vrot.slane %v213, 1
      %v260 = vrot.slane %v215, 1
      %v261 = vrot.slane %v217, 1
      %v262 = vrot.slane %v219, 1
      %v263 = vrot.slane %v221, 1
      %v264 = vrot.slane %v223, 1
      %v265 = vrot.slane %v225, 1
      %v266 = vrot.slane %v227, 1
      %v267 = vrot.slane %v229, 1
      %v268 = vrot.slane %v231, 1
      %v269 = vrot.slane %v233, 1
      %v270 = vrot.slane %v235, 1
      %v271 = vrot.slane %v237, 1
      %v272 = vrot.slane %v239, 1
      %vm305 = vcmask 1040384
      %v306 = vrot.slane %v211, 7
      %v307 = vrot.slane %v212, 7
      %v308 = vsel %vm305, %v306, %v307
      %v309 = vrot.slane %v209, 7
      %v310 = vrot.slane %v210, 7
      %v311 = vsel %vm305, %v309, %v310
      %v312 = vrot.slane %v213, 7
      %v313 = vrot.slane %v214, 7
      %v314 = vsel %vm305, %v312, %v313
      %v315 = vrot.slane %v215, 7
      %v316 = vrot.slane %v216, 7
      %v317 = vsel %vm305, %v315, %v316
      %v318 = vrot.slane %v217, 7
      %v319 = vrot.slane %v218, 7
      %v320 = vsel %vm305, %v318, %v319
      %v321 = vrot.slane %v219, 7
      %v322 = vrot.slane %v220, 7
      %v323 = vsel %vm305, %v321, %v322
      %v324 = vrot.slane %v221, 7
      %v325 = vrot.slane %v222, 7
      %v326 = vsel %vm305, %v324, %v325
      %v327 = vrot.slane %v223, 7
      %v328 = vrot.slane %v224, 7
      %v329 = vsel %vm305, %v327, %v328
      %v330 = vrot.slane %v225, 7
      %v331 = vrot.slane %v226, 7
      %v332 = vsel %vm305, %v330, %v331
      %v333 = vrot.slane %v227, 7
      %v334 = vrot.slane %v228, 7
      %v335 = vsel %vm305, %v333, %v334
      %v336 = vrot.slane %v229, 7
      %v337 = vrot.slane %v230, 7
      %v338 = vsel %vm305, %v336, %v337
      %v339 = vrot.slane %v231, 7
      %v340 = vrot.slane %v232, 7
      %v341 = vsel %vm305, %v339, %v340
      %v342 = vrot.slane %v233, 7
      %v343 = vrot.slane %v234, 7
      %v344 = vsel %vm305, %v342, %v343
      %v345 = vrot.slane %v235, 7
      %v346 = vrot.slane %v236, 7
      %v347 = vsel %vm305, %v345, %v346
      %v348 = vrot.slane %v237, 7
      %v349 = vrot.slane %v238, 7
      %v350 = vsel %vm305, %v348, %v349
      %v351 = vrot.slane %v239, 7
      %v352 = vrot.slane %v240, 7
      %v353 = vsel %vm305, %v351, %v352
      %v401 = vrot.slane %v212, 5
      %v402 = vrot.slane %v210, 5
      %v403 = vrot.slane %v214, 5
      %v404 = vrot.slane %v216, 5
      %v405 = vrot.slane %v218, 5
      %v406 = vrot.slane %v220, 5
      %v407 = vrot.slane %v222, 5
      %v408 = vrot.slane %v224, 5
      %v409 = vrot.slane %v226, 5
      %v410 = vrot.slane %v228, 5
      %v411 = vrot.slane %v230, 5
      %v412 = vrot.slane %v232, 5
      %v413 = vrot.slane %v234, 5
      %v414 = vrot.slane %v236, 5
      %v415 = vrot.slane %v238, 5
      %v416 = vrot.slane %v240, 5
      %v433 = vsel %vm305, %v257, %v306
      %v434 = vsel %vm305, %v258, %v309
      %v435 = vsel %vm305, %v259, %v312
      %v436 = vsel %vm305, %v260, %v315
      %v437 = vsel %vm305, %v261, %v318
      %v438 = vsel %vm305, %v262, %v321
      %v439 = vsel %vm305, %v263, %v324
      %v440 = vsel %vm305, %v264, %v327
      %v441 = vsel %vm305, %v265, %v330
      %v442 = vsel %vm305, %v266, %v333
      %v443 = vsel %vm305, %v267, %v336
      %v444 = vsel %vm305, %v268, %v339
      %v445 = vsel %vm305, %v269, %v342
      %v446 = vsel %vm305, %v270, %v345
      %v447 = vsel %vm305, %v271, %v348
      %v448 = vsel %vm305, %v272, %v351
      %v449 = vsel %vm305, %v307, %v401
      %v450 = vsel %vm305, %v310, %v402
      %v451 = vsel %vm305, %v313, %v403
      %v452 = vsel %vm305, %v316, %v404
      %v453 = vsel %vm305, %v319, %v405
      %v454 = vsel %vm305, %v322, %v406
      %v455 = vsel %vm305, %v325, %v407
      %v456 = vsel %vm305, %v328, %v408
      %v457 = vsel %vm305, %v331, %v409
      %v458 = vsel %vm305, %v334, %v410
      %v459 = vsel %vm305, %v337, %v411
      %v460 = vsel %vm305, %v340, %v412
      %v461 = vsel %vm305, %v343, %v413
      %v462 = vsel %vm305, %v346, %v414
      %v463 = vsel %vm305, %v349, %v415
      %v464 = vsel %vm305, %v352, %v416
      %vm495 = vcmask 1046528
      %v496 = vrot.slane %v433, 1
      %v497 = vrot.slane %v308, 1
      %v498 = vsel %vm495, %v496, %v497
      %v499 = vrot.slane %v449, 1
      %v500 = vsel %vm495, %v497, %v499
      %v501 = vrot.slane %v434, 1
      %v502 = vrot.slane %v311, 1
      %v503 = vsel %vm495, %v501, %v502
      %v504 = vrot.slane %v450, 1
      %v505 = vsel %vm495, %v502, %v504
      %v506 = vrot.slane %v435, 1
      %v507 = vrot.slane %v314, 1
      %v508 = vsel %vm495, %v506, %v507
      %v509 = vrot.slane %v451, 1
      %v510 = vsel %vm495, %v507, %v509
      %v511 = vrot.slane %v436, 1
      %v512 = vrot.slane %v317, 1
      %v513 = vsel %vm495, %v511, %v512
      %v514 = vrot.slane %v452, 1
      %v515 = vsel %vm495, %v512, %v514
      %v516 = vrot.slane %v437, 1
      %v517 = vrot.slane %v320, 1
      %v518 = vsel %vm495, %v516, %v517
      %v519 = vrot.slane %v453, 1
      %v520 = vsel %vm495, %v517, %v519
      %v521 = vrot.slane %v438, 1
      %v522 = vrot.slane %v323, 1
      %v523 = vsel %vm495, %v521, %v522
      %v524 = vrot.slane %v454, 1
      %v525 = vsel %vm495, %v522, %v524
      %v526 = vrot.slane %v439, 1
      %v527 = vrot.slane %v326, 1
      %v528 = vsel %vm495, %v526, %v527
      %v529 = vrot.slane %v455, 1
      %v530 = vsel %vm495, %v527, %v529
      %v531 = vrot.slane %v440, 1
      %v532 = vrot.slane %v329, 1
      %v533 = vsel %vm495, %v531, %v532
      %v534 = vrot.slane %v456, 1
      %v535 = vsel %vm495, %v532, %v534
      %v536 = vrot.slane %v441, 1
      %v537 = vrot.slane %v332, 1
      %v538 = vsel %vm495, %v536, %v537
      %v539 = vrot.slane %v457, 1
      %v540 = vsel %vm495, %v537, %v539
      %v541 = vrot.slane %v442, 1
      %v542 = vrot.slane %v335, 1
      %v543 = vsel %vm495, %v541, %v542
      %v544 = vrot.slane %v458, 1
      %v545 = vsel %vm495, %v542, %v544
      %v546 = vrot.slane %v443, 1
      %v547 = vrot.slane %v338, 1
      %v548 = vsel %vm495, %v546, %v547
      %v549 = vrot.slane %v459, 1
      %v550 = vsel %vm495, %v547, %v549
      %v551 = vrot.slane %v444, 1
      %v552 = vrot.slane %v341, 1
      %v553 = vsel %vm495, %v551, %v552
      %v554 = vrot.slane %v460, 1
      %v555 = vsel %vm495, %v552, %v554
      %v556 = vrot.slane %v445, 1
      %v557 = vrot.slane %v344, 1
      %v558 = vsel %vm495, %v556, %v557
      %v559 = vrot.slane %v461, 1
      %v560 = vsel %vm495, %v557, %v559
      %v561 = vrot.slane %v446, 1
      %v562 = vrot.slane %v347, 1
      %v563 = vsel %vm495, %v561, %v562
      %v564 = vrot.slane %v462, 1
      %v565 = vsel %vm495, %v562, %v564
      %v566 = vrot.slane %v447, 1
      %v567 = vrot.slane %v350, 1
      %v568 = vsel %vm495, %v566, %v567
      %v569 = vrot.slane %v463, 1
      %v570 = vsel %vm495, %v567, %v569
      %571 = vrot.lane.b32.xlu0 %v498, 4
      %v572 = vpop.permute.xlu0 %571
      %573 = vrot.lane.b32.xlu0 %v500, 4
      %v574 = vpop.permute.xlu0 %573
      %575 = vrot.lane.b32.xlu0 %v503, 4
      %v576 = vpop.permute.xlu0 %575
      %577 = vrot.lane.b32.xlu0 %v505, 4
      %v578 = vpop.permute.xlu0 %577
      %579 = vrot.lane.b32.xlu0 %v508, 4
      %v580 = vpop.permute.xlu0 %579
      %581 = vrot.lane.b32.xlu0 %v510, 4
      %v582 = vpop.permute.xlu0 %581
      %583 = vrot.lane.b32.xlu0 %v513, 4
      %v584 = vpop.permute.xlu0 %583
      %585 = vrot.lane.b32.xlu0 %v515, 4
      %v586 = vpop.permute.xlu0 %585
      %587 = vrot.lane.b32.xlu0 %v518, 4
      %v588 = vpop.permute.xlu0 %587
      %589 = vrot.lane.b32.xlu0 %v520, 4
      %v590 = vpop.permute.xlu0 %589
      %591 = vrot.lane.b32.xlu0 %v523, 4
      %v592 = vpop.permute.xlu0 %591
      %593 = vrot.lane.b32.xlu0 %v525, 4
      %v594 = vpop.permute.xlu0 %593
      %595 = vrot.lane.b32.xlu0 %v528, 4
      %v596 = vpop.permute.xlu0 %595
      %597 = vrot.lane.b32.xlu0 %v530, 4
      %v598 = vpop.permute.xlu0 %597
      %599 = vrot.lane.b32.xlu0 %v533, 4
      %v600 = vpop.permute.xlu0 %599
      %601 = vrot.lane.b32.xlu0 %v535, 4
      %v602 = vpop.permute.xlu0 %601
      %603 = vrot.lane.b32.xlu0 %v538, 4
      %v604 = vpop.permute.xlu0 %603
      %605 = vrot.lane.b32.xlu0 %v540, 4
      %v606 = vpop.permute.xlu0 %605
      %607 = vrot.lane.b32.xlu0 %v543, 4
      %v608 = vpop.permute.xlu0 %607
      %609 = vrot.lane.b32.xlu0 %v545, 4
      %v610 = vpop.permute.xlu0 %609
      %611 = vrot.lane.b32.xlu0 %v548, 4
      %v612 = vpop.permute.xlu0 %611
      %613 = vrot.lane.b32.xlu0 %v550, 4
      %v614 = vpop.permute.xlu0 %613
      %615 = vrot.lane.b32.xlu0 %v553, 4
      %v616 = vpop.permute.xlu0 %615
      %617 = vrot.lane.b32.xlu0 %v555, 4
      %v618 = vpop.permute.xlu0 %617
      %619 = vrot.lane.b32.xlu0 %v558, 4
      %v620 = vpop.permute.xlu0 %619
      %621 = vrot.lane.b32.xlu0 %v560, 4
      %v622 = vpop.permute.xlu0 %621
      %623 = vrot.lane.b32.xlu0 %v563, 4
      %v624 = vpop.permute.xlu0 %623
      %625 = vrot.lane.b32.xlu0 %v565, 4
      %v626 = vpop.permute.xlu0 %625
      %627 = vrot.lane.b32.xlu0 %v568, 4
      %v628 = vpop.permute.xlu0 %627
      %629 = vrot.lane.b32.xlu0 %v570, 4
      %v630 = vpop.permute.xlu0 %629
      %vm661 = vcmask 1045504
      %v662 = vrot.slane %v433, 2
      %v663 = vrot.slane %v308, 2
      %v664 = vsel %vm661, %v662, %v663
      %v665 = vrot.slane %v449, 2
      %v666 = vsel %vm661, %v663, %v665
      %v667 = vrot.slane %v434, 2
      %v668 = vrot.slane %v311, 2
      %v669 = vsel %vm661, %v667, %v668
      %v670 = vrot.slane %v450, 2
      %v671 = vsel %vm661, %v668, %v670
      %v672 = vrot.slane %v435, 2
      %v673 = vrot.slane %v314, 2
      %v674 = vsel %vm661, %v672, %v673
      %v675 = vrot.slane %v451, 2
      %v676 = vsel %vm661, %v673, %v675
      %v677 = vrot.slane %v436, 2
      %v678 = vrot.slane %v317, 2
      %v679 = vsel %vm661, %v677, %v678
      %v680 = vrot.slane %v452, 2
      %v681 = vsel %vm661, %v678, %v680
      %v682 = vrot.slane %v437, 2
      %v683 = vrot.slane %v320, 2
      %v684 = vsel %vm661, %v682, %v683
      %v685 = vrot.slane %v453, 2
      %v686 = vsel %vm661, %v683, %v685
      %v687 = vrot.slane %v438, 2
      %v688 = vrot.slane %v323, 2
      %v689 = vsel %vm661, %v687, %v688
      %v690 = vrot.slane %v454, 2
      %v691 = vsel %vm661, %v688, %v690
      %v692 = vrot.slane %v439, 2
      %v693 = vrot.slane %v326, 2
      %v694 = vsel %vm661, %v692, %v693
      %v695 = vrot.slane %v455, 2
      %v696 = vsel %vm661, %v693, %v695
      %v697 = vrot.slane %v440, 2
      %v698 = vrot.slane %v329, 2
      %v699 = vsel %vm661, %v697, %v698
      %v700 = vrot.slane %v456, 2
      %v701 = vsel %vm661, %v698, %v700
      %v702 = vrot.slane %v441, 2
      %v703 = vrot.slane %v332, 2
      %v704 = vsel %vm661, %v702, %v703
      %v705 = vrot.slane %v457, 2
      %v706 = vsel %vm661, %v703, %v705
      %v707 = vrot.slane %v442, 2
      %v708 = vrot.slane %v335, 2
      %v709 = vsel %vm661, %v707, %v708
      %v710 = vrot.slane %v458, 2
      %v711 = vsel %vm661, %v708, %v710
      %v712 = vrot.slane %v443, 2
      %v713 = vrot.slane %v338, 2
      %v714 = vsel %vm661, %v712, %v713
      %v715 = vrot.slane %v459, 2
      %v716 = vsel %vm661, %v713, %v715
      %v717 = vrot.slane %v444, 2
      %v718 = vrot.slane %v341, 2
      %v719 = vsel %vm661, %v717, %v718
      %v720 = vrot.slane %v460, 2
      %v721 = vsel %vm661, %v718, %v720
      %v722 = vrot.slane %v445, 2
      %v723 = vrot.slane %v344, 2
      %v724 = vsel %vm661, %v722, %v723
      %v725 = vrot.slane %v461, 2
      %v726 = vsel %vm661, %v723, %v725
      %v727 = vrot.slane %v446, 2
      %v728 = vrot.slane %v347, 2
      %v729 = vsel %vm661, %v727, %v728
      %v730 = vrot.slane %v462, 2
      %v731 = vsel %vm661, %v728, %v730
      %v732 = vrot.slane %v447, 2
      %v733 = vrot.slane %v350, 2
      %v734 = vsel %vm661, %v732, %v733
      %v735 = vrot.slane %v463, 2
      %v736 = vsel %vm661, %v733, %v735
      %737 = vrot.lane.b32.xlu0 %v664, 8
      %v738 = vpop.permute.xlu0 %737
      %739 = vrot.lane.b32.xlu0 %v666, 8
      %v740 = vpop.permute.xlu0 %739
      %741 = vrot.lane.b32.xlu0 %v669, 8
      %v742 = vpop.permute.xlu0 %741
      %743 = vrot.lane.b32.xlu0 %v671, 8
      %v744 = vpop.permute.xlu0 %743
      %745 = vrot.lane.b32.xlu0 %v674, 8
      %v746 = vpop.permute.xlu0 %745
      %747 = vrot.lane.b32.xlu0 %v676, 8
      %v748 = vpop.permute.xlu0 %747
      %749 = vrot.lane.b32.xlu0 %v679, 8
      %v750 = vpop.permute.xlu0 %749
      %751 = vrot.lane.b32.xlu0 %v681, 8
      %v752 = vpop.permute.xlu0 %751
      %753 = vrot.lane.b32.xlu0 %v684, 8
      %v754 = vpop.permute.xlu0 %753
      %755 = vrot.lane.b32.xlu0 %v686, 8
      %v756 = vpop.permute.xlu0 %755
      %757 = vrot.lane.b32.xlu0 %v689, 8
      %v758 = vpop.permute.xlu0 %757
      %759 = vrot.lane.b32.xlu0 %v691, 8
      %v760 = vpop.permute.xlu0 %759
      %761 = vrot.lane.b32.xlu0 %v694, 8
      %v762 = vpop.permute.xlu0 %761
      %763 = vrot.lane.b32.xlu0 %v696, 8
      %v764 = vpop.permute.xlu0 %763
      %765 = vrot.lane.b32.xlu0 %v699, 8
      %v766 = vpop.permute.xlu0 %765
      %767 = vrot.lane.b32.xlu0 %v701, 8
      %v768 = vpop.permute.xlu0 %767
      %769 = vrot.lane.b32.xlu0 %v704, 8
      %v770 = vpop.permute.xlu0 %769
      %771 = vrot.lane.b32.xlu0 %v706, 8
      %v772 = vpop.permute.xlu0 %771
      %773 = vrot.lane.b32.xlu0 %v709, 8
      %v774 = vpop.permute.xlu0 %773
      %775 = vrot.lane.b32.xlu0 %v711, 8
      %v776 = vpop.permute.xlu0 %775
      %777 = vrot.lane.b32.xlu0 %v714, 8
      %v778 = vpop.permute.xlu0 %777
      %779 = vrot.lane.b32.xlu0 %v716, 8
      %v780 = vpop.permute.xlu0 %779
      %781 = vrot.lane.b32.xlu0 %v719, 8
      %v782 = vpop.permute.xlu0 %781
      %783 = vrot.lane.b32.xlu0 %v721, 8
      %v784 = vpop.permute.xlu0 %783
      %785 = vrot.lane.b32.xlu0 %v724, 8
      %v786 = vpop.permute.xlu0 %785
      %787 = vrot.lane.b32.xlu0 %v726, 8
      %v788 = vpop.permute.xlu0 %787
      %789 = vrot.lane.b32.xlu0 %v729, 8
      %v790 = vpop.permute.xlu0 %789
      %791 = vrot.lane.b32.xlu0 %v731, 8
      %v792 = vpop.permute.xlu0 %791
      %793 = vrot.lane.b32.xlu0 %v734, 8
      %v794 = vpop.permute.xlu0 %793
      %795 = vrot.lane.b32.xlu0 %v736, 8
      %v796 = vpop.permute.xlu0 %795
      %828 = vrot.lane.b32.xlu0 %v434, 12
      %v829 = vpop.permute.xlu0 %828
      %830 = vrot.lane.b32.xlu0 %v311, 12
      %v831 = vpop.permute.xlu0 %830
      %832 = vrot.lane.b32.xlu0 %v433, 12
      %v833 = vpop.permute.xlu0 %832
      %834 = vrot.lane.b32.xlu0 %v308, 12
      %v835 = vpop.permute.xlu0 %834
      %836 = vrot.lane.b32.xlu0 %v435, 12
      %v837 = vpop.permute.xlu0 %836
      %838 = vrot.lane.b32.xlu0 %v314, 12
      %v839 = vpop.permute.xlu0 %838
      %840 = vrot.lane.b32.xlu0 %v436, 12
      %v841 = vpop.permute.xlu0 %840
      %842 = vrot.lane.b32.xlu0 %v317, 12
      %v843 = vpop.permute.xlu0 %842
      %844 = vrot.lane.b32.xlu0 %v437, 12
      %v845 = vpop.permute.xlu0 %844
      %846 = vrot.lane.b32.xlu0 %v320, 12
      %v847 = vpop.permute.xlu0 %846
      %848 = vrot.lane.b32.xlu0 %v438, 12
      %v849 = vpop.permute.xlu0 %848
      %850 = vrot.lane.b32.xlu0 %v323, 12
      %v851 = vpop.permute.xlu0 %850
      %852 = vrot.lane.b32.xlu0 %v439, 12
      %v853 = vpop.permute.xlu0 %852
      %854 = vrot.lane.b32.xlu0 %v326, 12
      %v855 = vpop.permute.xlu0 %854
      %856 = vrot.lane.b32.xlu0 %v440, 12
      %v857 = vpop.permute.xlu0 %856
      %858 = vrot.lane.b32.xlu0 %v329, 12
      %v859 = vpop.permute.xlu0 %858
      %860 = vrot.lane.b32.xlu0 %v441, 12
      %v861 = vpop.permute.xlu0 %860
      %862 = vrot.lane.b32.xlu0 %v332, 12
      %v863 = vpop.permute.xlu0 %862
      %864 = vrot.lane.b32.xlu0 %v442, 12
      %v865 = vpop.permute.xlu0 %864
      %866 = vrot.lane.b32.xlu0 %v335, 12
      %v867 = vpop.permute.xlu0 %866
      %868 = vrot.lane.b32.xlu0 %v443, 12
      %v869 = vpop.permute.xlu0 %868
      %870 = vrot.lane.b32.xlu0 %v338, 12
      %v871 = vpop.permute.xlu0 %870
      %872 = vrot.lane.b32.xlu0 %v444, 12
      %v873 = vpop.permute.xlu0 %872
      %874 = vrot.lane.b32.xlu0 %v341, 12
      %v875 = vpop.permute.xlu0 %874
      %876 = vrot.lane.b32.xlu0 %v445, 12
      %v877 = vpop.permute.xlu0 %876
      %878 = vrot.lane.b32.xlu0 %v344, 12
      %v879 = vpop.permute.xlu0 %878
      %880 = vrot.lane.b32.xlu0 %v446, 12
      %v881 = vpop.permute.xlu0 %880
      %882 = vrot.lane.b32.xlu0 %v347, 12
      %v883 = vpop.permute.xlu0 %882
      %884 = vrot.lane.b32.xlu0 %v447, 12
      %v885 = vpop.permute.xlu0 %884
      %886 = vrot.lane.b32.xlu0 %v350, 12
      %v887 = vpop.permute.xlu0 %886
      %888 = vrot.lane.b32.xlu0 %v448, 12
      %v889 = vpop.permute.xlu0 %888
      %890 = vrot.lane.b32.xlu0 %v353, 12
      %v891 = vpop.permute.xlu0 %890
      %v925 = vrot.slane %v448, 1
      %v926 = vrot.slane %v353, 1
      %v927 = vsel %vm495, %v925, %v926
      %v928 = vrot.slane %v464, 1
      %v929 = vsel %vm495, %v926, %v928
      %930 = vrot.lane.b32.xlu0 %v503, 16
      %v931 = vpop.permute.xlu0 %930
      %932 = vrot.lane.b32.xlu0 %v505, 16
      %v933 = vpop.permute.xlu0 %932
      %934 = vrot.lane.b32.xlu0 %v498, 16
      %v935 = vpop.permute.xlu0 %934
      %936 = vrot.lane.b32.xlu0 %v500, 16
      %v937 = vpop.permute.xlu0 %936
      %938 = vrot.lane.b32.xlu0 %v508, 16
      %v939 = vpop.permute.xlu0 %938
      %940 = vrot.lane.b32.xlu0 %v510, 16
      %v941 = vpop.permute.xlu0 %940
      %942 = vrot.lane.b32.xlu0 %v513, 16
      %v943 = vpop.permute.xlu0 %942
      %944 = vrot.lane.b32.xlu0 %v515, 16
      %v945 = vpop.permute.xlu0 %944
      %946 = vrot.lane.b32.xlu0 %v518, 16
      %v947 = vpop.permute.xlu0 %946
      %948 = vrot.lane.b32.xlu0 %v520, 16
      %v949 = vpop.permute.xlu0 %948
      %950 = vrot.lane.b32.xlu0 %v523, 16
      %v951 = vpop.permute.xlu0 %950
      %952 = vrot.lane.b32.xlu0 %v525, 16
      %v953 = vpop.permute.xlu0 %952
      %954 = vrot.lane.b32.xlu0 %v528, 16
      %v955 = vpop.permute.xlu0 %954
      %956 = vrot.lane.b32.xlu0 %v530, 16
      %v957 = vpop.permute.xlu0 %956
      %958 = vrot.lane.b32.xlu0 %v533, 16
      %v959 = vpop.permute.xlu0 %958
      %960 = vrot.lane.b32.xlu0 %v535, 16
      %v961 = vpop.permute.xlu0 %960
      %962 = vrot.lane.b32.xlu0 %v538, 16
      %v963 = vpop.permute.xlu0 %962
      %964 = vrot.lane.b32.xlu0 %v540, 16
      %v965 = vpop.permute.xlu0 %964
      %966 = vrot.lane.b32.xlu0 %v543, 16
      %v967 = vpop.permute.xlu0 %966
      %968 = vrot.lane.b32.xlu0 %v545, 16
      %v969 = vpop.permute.xlu0 %968
      %970 = vrot.lane.b32.xlu0 %v548, 16
      %v971 = vpop.permute.xlu0 %970
      %972 = vrot.lane.b32.xlu0 %v550, 16
      %v973 = vpop.permute.xlu0 %972
      %974 = vrot.lane.b32.xlu0 %v553, 16
      %v975 = vpop.permute.xlu0 %974
      %976 = vrot.lane.b32.xlu0 %v555, 16
      %v977 = vpop.permute.xlu0 %976
      %978 = vrot.lane.b32.xlu0 %v558, 16
      %v979 = vpop.permute.xlu0 %978
      %980 = vrot.lane.b32.xlu0 %v560, 16
      %v981 = vpop.permute.xlu0 %980
      %982 = vrot.lane.b32.xlu0 %v563, 16
      %v983 = vpop.permute.xlu0 %982
      %984 = vrot.lane.b32.xlu0 %v565, 16
      %v985 = vpop.permute.xlu0 %984
      %986 = vrot.lane.b32.xlu0 %v568, 16
      %v987 = vpop.permute.xlu0 %986
      %988 = vrot.lane.b32.xlu0 %v570, 16
      %v989 = vpop.permute.xlu0 %988
      %990 = vrot.lane.b32.xlu0 %v927, 16
      %v991 = vpop.permute.xlu0 %990
      %992 = vrot.lane.b32.xlu0 %v929, 16
      %v993 = vpop.permute.xlu0 %992
      %v1026 = vrot.slane %v448, 2
      %v1027 = vrot.slane %v353, 2
      %v1028 = vsel %vm661, %v1026, %v1027
      %v1029 = vrot.slane %v464, 2
      %v1030 = vsel %vm661, %v1027, %v1029
      %1031 = vrot.lane.b32.xlu0 %v669, 20
      %v1032 = vpop.permute.xlu0 %1031
      %1033 = vrot.lane.b32.xlu0 %v671, 20
      %v1034 = vpop.permute.xlu0 %1033
      %1035 = vrot.lane.b32.xlu0 %v664, 20
      %v1036 = vpop.permute.xlu0 %1035
      %1037 = vrot.lane.b32.xlu0 %v666, 20
      %v1038 = vpop.permute.xlu0 %1037
      %1039 = vrot.lane.b32.xlu0 %v674, 20
      %v1040 = vpop.permute.xlu0 %1039
      %1041 = vrot.lane.b32.xlu0 %v676, 20
      %v1042 = vpop.permute.xlu0 %1041
      %1043 = vrot.lane.b32.xlu0 %v679, 20
      %v1044 = vpop.permute.xlu0 %1043
      %1045 = vrot.lane.b32.xlu0 %v681, 20
      %v1046 = vpop.permute.xlu0 %1045
      %1047 = vrot.lane.b32.xlu0 %v684, 20
      %v1048 = vpop.permute.xlu0 %1047
      %1049 = vrot.lane.b32.xlu0 %v686, 20
      %v1050 = vpop.permute.xlu0 %1049
      %1051 = vrot.lane.b32.xlu0 %v689, 20
      %v1052 = vpop.permute.xlu0 %1051
      %1053 = vrot.lane.b32.xlu0 %v691, 20
      %v1054 = vpop.permute.xlu0 %1053
      %1055 = vrot.lane.b32.xlu0 %v694, 20
      %v1056 = vpop.permute.xlu0 %1055
      %1057 = vrot.lane.b32.xlu0 %v696, 20
      %v1058 = vpop.permute.xlu0 %1057
      %1059 = vrot.lane.b32.xlu0 %v699, 20
      %v1060 = vpop.permute.xlu0 %1059
      %1061 = vrot.lane.b32.xlu0 %v701, 20
      %v1062 = vpop.permute.xlu0 %1061
      %1063 = vrot.lane.b32.xlu0 %v704, 20
      %v1064 = vpop.permute.xlu0 %1063
      %1065 = vrot.lane.b32.xlu0 %v706, 20
      %v1066 = vpop.permute.xlu0 %1065
      %1067 = vrot.lane.b32.xlu0 %v709, 20
      %v1068 = vpop.permute.xlu0 %1067
      %1069 = vrot.lane.b32.xlu0 %v711, 20
      %v1070 = vpop.permute.xlu0 %1069
      %1071 = vrot.lane.b32.xlu0 %v714, 20
      %v1072 = vpop.permute.xlu0 %1071
      %1073 = vrot.lane.b32.xlu0 %v716, 20
      %v1074 = vpop.permute.xlu0 %1073
      %1075 = vrot.lane.b32.xlu0 %v719, 20
      %v1076 = vpop.permute.xlu0 %1075
      %1077 = vrot.lane.b32.xlu0 %v721, 20
      %v1078 = vpop.permute.xlu0 %1077
      %1079 = vrot.lane.b32.xlu0 %v724, 20
      %v1080 = vpop.permute.xlu0 %1079
      %1081 = vrot.lane.b32.xlu0 %v726, 20
      %v1082 = vpop.permute.xlu0 %1081
      %1083 = vrot.lane.b32.xlu0 %v729, 20
      %v1084 = vpop.permute.xlu0 %1083
      %1085 = vrot.lane.b32.xlu0 %v731, 20
      %v1086 = vpop.permute.xlu0 %1085
      %1087 = vrot.lane.b32.xlu0 %v734, 20
      %v1088 = vpop.permute.xlu0 %1087
      %1089 = vrot.lane.b32.xlu0 %v736, 20
      %v1090 = vpop.permute.xlu0 %1089
      %1091 = vrot.lane.b32.xlu0 %v1028, 20
      %v1092 = vpop.permute.xlu0 %1091
      %1093 = vrot.lane.b32.xlu0 %v1030, 20
      %v1094 = vpop.permute.xlu0 %1093
      %1127 = vrot.lane.b32.xlu0 %v433, 24
      %v1128 = vpop.permute.xlu0 %1127
      %1129 = vrot.lane.b32.xlu0 %v308, 24
      %v1130 = vpop.permute.xlu0 %1129
      %1131 = vrot.lane.b32.xlu0 %v435, 24
      %v1132 = vpop.permute.xlu0 %1131
      %1133 = vrot.lane.b32.xlu0 %v314, 24
      %v1134 = vpop.permute.xlu0 %1133
      %1135 = vrot.lane.b32.xlu0 %v436, 24
      %v1136 = vpop.permute.xlu0 %1135
      %1137 = vrot.lane.b32.xlu0 %v317, 24
      %v1138 = vpop.permute.xlu0 %1137
      %1139 = vrot.lane.b32.xlu0 %v437, 24
      %v1140 = vpop.permute.xlu0 %1139
      %1141 = vrot.lane.b32.xlu0 %v320, 24
      %v1142 = vpop.permute.xlu0 %1141
      %1143 = vrot.lane.b32.xlu0 %v438, 24
      %v1144 = vpop.permute.xlu0 %1143
      %1145 = vrot.lane.b32.xlu0 %v323, 24
      %v1146 = vpop.permute.xlu0 %1145
      %1147 = vrot.lane.b32.xlu0 %v439, 24
      %v1148 = vpop.permute.xlu0 %1147
      %1149 = vrot.lane.b32.xlu0 %v326, 24
      %v1150 = vpop.permute.xlu0 %1149
      %1151 = vrot.lane.b32.xlu0 %v440, 24
      %v1152 = vpop.permute.xlu0 %1151
      %1153 = vrot.lane.b32.xlu0 %v329, 24
      %v1154 = vpop.permute.xlu0 %1153
      %1155 = vrot.lane.b32.xlu0 %v441, 24
      %v1156 = vpop.permute.xlu0 %1155
      %1157 = vrot.lane.b32.xlu0 %v332, 24
      %v1158 = vpop.permute.xlu0 %1157
      %1159 = vrot.lane.b32.xlu0 %v442, 24
      %v1160 = vpop.permute.xlu0 %1159
      %1161 = vrot.lane.b32.xlu0 %v335, 24
      %v1162 = vpop.permute.xlu0 %1161
      %1163 = vrot.lane.b32.xlu0 %v443, 24
      %v1164 = vpop.permute.xlu0 %1163
      %1165 = vrot.lane.b32.xlu0 %v338, 24
      %v1166 = vpop.permute.xlu0 %1165
      %1167 = vrot.lane.b32.xlu0 %v444, 24
      %v1168 = vpop.permute.xlu0 %1167
      %1169 = vrot.lane.b32.xlu0 %v341, 24
      %v1170 = vpop.permute.xlu0 %1169
      %1171 = vrot.lane.b32.xlu0 %v445, 24
      %v1172 = vpop.permute.xlu0 %1171
      %1173 = vrot.lane.b32.xlu0 %v344, 24
      %v1174 = vpop.permute.xlu0 %1173
      %1175 = vrot.lane.b32.xlu0 %v446, 24
      %v1176 = vpop.permute.xlu0 %1175
      %1177 = vrot.lane.b32.xlu0 %v347, 24
      %v1178 = vpop.permute.xlu0 %1177
      %1179 = vrot.lane.b32.xlu0 %v447, 24
      %v1180 = vpop.permute.xlu0 %1179
      %1181 = vrot.lane.b32.xlu0 %v350, 24
      %v1182 = vpop.permute.xlu0 %1181
      %1183 = vrot.lane.b32.xlu0 %v448, 24
      %v1184 = vpop.permute.xlu0 %1183
      %1185 = vrot.lane.b32.xlu0 %v353, 24
      %v1186 = vpop.permute.xlu0 %1185
      %1217 = vrot.lane.b32.xlu0 %v498, 28
      %v1218 = vpop.permute.xlu0 %1217
      %1219 = vrot.lane.b32.xlu0 %v500, 28
      %v1220 = vpop.permute.xlu0 %1219
      %1221 = vrot.lane.b32.xlu0 %v508, 28
      %v1222 = vpop.permute.xlu0 %1221
      %1223 = vrot.lane.b32.xlu0 %v510, 28
      %v1224 = vpop.permute.xlu0 %1223
      %1225 = vrot.lane.b32.xlu0 %v513, 28
      %v1226 = vpop.permute.xlu0 %1225
      %1227 = vrot.lane.b32.xlu0 %v515, 28
      %v1228 = vpop.permute.xlu0 %1227
      %1229 = vrot.lane.b32.xlu0 %v518, 28
      %v1230 = vpop.permute.xlu0 %1229
      %1231 = vrot.lane.b32.xlu0 %v520, 28
      %v1232 = vpop.permute.xlu0 %1231
      %1233 = vrot.lane.b32.xlu0 %v523, 28
      %v1234 = vpop.permute.xlu0 %1233
      %1235 = vrot.lane.b32.xlu0 %v525, 28
      %v1236 = vpop.permute.xlu0 %1235
      %1237 = vrot.lane.b32.xlu0 %v528, 28
      %v1238 = vpop.permute.xlu0 %1237
      %1239 = vrot.lane.b32.xlu0 %v530, 28
      %v1240 = vpop.permute.xlu0 %1239
      %1241 = vrot.lane.b32.xlu0 %v533, 28
      %v1242 = vpop.permute.xlu0 %1241
      %1243 = vrot.lane.b32.xlu0 %v535, 28
      %v1244 = vpop.permute.xlu0 %1243
      %1245 = vrot.lane.b32.xlu0 %v538, 28
      %v1246 = vpop.permute.xlu0 %1245
      %1247 = vrot.lane.b32.xlu0 %v540, 28
      %v1248 = vpop.permute.xlu0 %1247
      %1249 = vrot.lane.b32.xlu0 %v543, 28
      %v1250 = vpop.permute.xlu0 %1249
      %1251 = vrot.lane.b32.xlu0 %v545, 28
      %v1252 = vpop.permute.xlu0 %1251
      %1253 = vrot.lane.b32.xlu0 %v548, 28
      %v1254 = vpop.permute.xlu0 %1253
      %1255 = vrot.lane.b32.xlu0 %v550, 28
      %v1256 = vpop.permute.xlu0 %1255
      %1257 = vrot.lane.b32.xlu0 %v553, 28
      %v1258 = vpop.permute.xlu0 %1257
      %1259 = vrot.lane.b32.xlu0 %v555, 28
      %v1260 = vpop.permute.xlu0 %1259
      %1261 = vrot.lane.b32.xlu0 %v558, 28
      %v1262 = vpop.permute.xlu0 %1261
      %1263 = vrot.lane.b32.xlu0 %v560, 28
      %v1264 = vpop.permute.xlu0 %1263
      %1265 = vrot.lane.b32.xlu0 %v563, 28
      %v1266 = vpop.permute.xlu0 %1265
      %1267 = vrot.lane.b32.xlu0 %v565, 28
      %v1268 = vpop.permute.xlu0 %1267
      %1269 = vrot.lane.b32.xlu0 %v568, 28
      %v1270 = vpop.permute.xlu0 %1269
      %1271 = vrot.lane.b32.xlu0 %v570, 28
      %v1272 = vpop.permute.xlu0 %1271
      %1273 = vrot.lane.b32.xlu0 %v927, 28
      %v1274 = vpop.permute.xlu0 %1273
      %1275 = vrot.lane.b32.xlu0 %v929, 28
      %v1276 = vpop.permute.xlu0 %1275
      %1307 = vrot.lane.b32.xlu0 %v664, 32
      %v1308 = vpop.permute.xlu0 %1307
      %1309 = vrot.lane.b32.xlu0 %v666, 32
      %v1310 = vpop.permute.xlu0 %1309
      %1311 = vrot.lane.b32.xlu0 %v674, 32
      %v1312 = vpop.permute.xlu0 %1311
      %1313 = vrot.lane.b32.xlu0 %v676, 32
      %v1314 = vpop.permute.xlu0 %1313
      %1315 = vrot.lane.b32.xlu0 %v679, 32
      %v1316 = vpop.permute.xlu0 %1315
      %1317 = vrot.lane.b32.xlu0 %v681, 32
      %v1318 = vpop.permute.xlu0 %1317
      %1319 = vrot.lane.b32.xlu0 %v684, 32
      %v1320 = vpop.permute.xlu0 %1319
      %1321 = vrot.lane.b32.xlu0 %v686, 32
      %v1322 = vpop.permute.xlu0 %1321
      %1323 = vrot.lane.b32.xlu0 %v689, 32
      %v1324 = vpop.permute.xlu0 %1323
      %1325 = vrot.lane.b32.xlu0 %v691, 32
      %v1326 = vpop.permute.xlu0 %1325
      %1327 = vrot.lane.b32.xlu0 %v694, 32
      %v1328 = vpop.permute.xlu0 %1327
      %1329 = vrot.lane.b32.xlu0 %v696, 32
      %v1330 = vpop.permute.xlu0 %1329
      %1331 = vrot.lane.b32.xlu0 %v699, 32
      %v1332 = vpop.permute.xlu0 %1331
      %1333 = vrot.lane.b32.xlu0 %v701, 32
      %v1334 = vpop.permute.xlu0 %1333
      %1335 = vrot.lane.b32.xlu0 %v704, 32
      %v1336 = vpop.permute.xlu0 %1335
      %1337 = vrot.lane.b32.xlu0 %v706, 32
      %v1338 = vpop.permute.xlu0 %1337
      %1339 = vrot.lane.b32.xlu0 %v709, 32
      %v1340 = vpop.permute.xlu0 %1339
      %1341 = vrot.lane.b32.xlu0 %v711, 32
      %v1342 = vpop.permute.xlu0 %1341
      %1343 = vrot.lane.b32.xlu0 %v714, 32
      %v1344 = vpop.permute.xlu0 %1343
      %1345 = vrot.lane.b32.xlu0 %v716, 32
      %v1346 = vpop.permute.xlu0 %1345
      %1347 = vrot.lane.b32.xlu0 %v719, 32
      %v1348 = vpop.permute.xlu0 %1347
      %1349 = vrot.lane.b32.xlu0 %v721, 32
      %v1350 = vpop.permute.xlu0 %1349
      %1351 = vrot.lane.b32.xlu0 %v724, 32
      %v1352 = vpop.permute.xlu0 %1351
      %1353 = vrot.lane.b32.xlu0 %v726, 32
      %v1354 = vpop.permute.xlu0 %1353
      %1355 = vrot.lane.b32.xlu0 %v729, 32
      %v1356 = vpop.permute.xlu0 %1355
      %1357 = vrot.lane.b32.xlu0 %v731, 32
      %v1358 = vpop.permute.xlu0 %1357
      %1359 = vrot.lane.b32.xlu0 %v734, 32
      %v1360 = vpop.permute.xlu0 %1359
      %1361 = vrot.lane.b32.xlu0 %v736, 32
      %v1362 = vpop.permute.xlu0 %1361
      %1363 = vrot.lane.b32.xlu0 %v1028, 32
      %v1364 = vpop.permute.xlu0 %1363
      %1365 = vrot.lane.b32.xlu0 %v1030, 32
      %v1366 = vpop.permute.xlu0 %1365
      %vm1397 = vcmask 31744
      %v1398 = vsel %vm1397, %v433, %v572
      %v1399 = vsel %vm1397, %v308, %v574
      %v1400 = vsel %vm1397, %v434, %v576
      %v1401 = vsel %vm1397, %v311, %v578
      %v1402 = vsel %vm1397, %v435, %v580
      %v1403 = vsel %vm1397, %v314, %v582
      %v1404 = vsel %vm1397, %v436, %v584
      %v1405 = vsel %vm1397, %v317, %v586
      %v1406 = vsel %vm1397, %v437, %v588
      %v1407 = vsel %vm1397, %v320, %v590
      %v1408 = vsel %vm1397, %v438, %v592
      %v1409 = vsel %vm1397, %v323, %v594
      %v1410 = vsel %vm1397, %v439, %v596
      %v1411 = vsel %vm1397, %v326, %v598
      %v1412 = vsel %vm1397, %v440, %v600
      %v1413 = vsel %vm1397, %v329, %v602
      %v1414 = vsel %vm1397, %v441, %v604
      %v1415 = vsel %vm1397, %v332, %v606
      %v1416 = vsel %vm1397, %v442, %v608
      %v1417 = vsel %vm1397, %v335, %v610
      %v1418 = vsel %vm1397, %v443, %v612
      %v1419 = vsel %vm1397, %v338, %v614
      %v1420 = vsel %vm1397, %v444, %v616
      %v1421 = vsel %vm1397, %v341, %v618
      %v1422 = vsel %vm1397, %v445, %v620
      %v1423 = vsel %vm1397, %v344, %v622
      %v1424 = vsel %vm1397, %v446, %v624
      %v1425 = vsel %vm1397, %v347, %v626
      %v1426 = vsel %vm1397, %v447, %v628
      %v1427 = vsel %vm1397, %v350, %v630
      %vm1428 = vcmask 64512
      %v1429 = vsel %vm1428, %v1398, %v738
      %v1430 = vsel %vm1428, %v1399, %v740
      %v1431 = vsel %vm1428, %v1400, %v742
      %v1432 = vsel %vm1428, %v1401, %v744
      %v1433 = vsel %vm1428, %v1402, %v746
      %v1434 = vsel %vm1428, %v1403, %v748
      %v1435 = vsel %vm1428, %v1404, %v750
      %v1436 = vsel %vm1428, %v1405, %v752
      %v1437 = vsel %vm1428, %v1406, %v754
      %v1438 = vsel %vm1428, %v1407, %v756
      %v1439 = vsel %vm1428, %v1408, %v758
      %v1440 = vsel %vm1428, %v1409, %v760
      %v1441 = vsel %vm1428, %v1410, %v762
      %v1442 = vsel %vm1428, %v1411, %v764
      %v1443 = vsel %vm1428, %v1412, %v766
      %v1444 = vsel %vm1428, %v1413, %v768
      %v1445 = vsel %vm1428, %v1414, %v770
      %v1446 = vsel %vm1428, %v1415, %v772
      %v1447 = vsel %vm1428, %v1416, %v774
      %v1448 = vsel %vm1428, %v1417, %v776
      %v1449 = vsel %vm1428, %v1418, %v778
      %v1450 = vsel %vm1428, %v1419, %v780
      %v1451 = vsel %vm1428, %v1420, %v782
      %v1452 = vsel %vm1428, %v1421, %v784
      %v1453 = vsel %vm1428, %v1422, %v786
      %v1454 = vsel %vm1428, %v1423, %v788
      %v1455 = vsel %vm1428, %v1424, %v790
      %v1456 = vsel %vm1428, %v1425, %v792
      %v1457 = vsel %vm1428, %v1426, %v794
      %v1458 = vsel %vm1428, %v1427, %v796
      %vm1459 = vcmask 97280
      %v1460 = vsel %vm1459, %v1429, %v829
      %v1461 = vsel %vm1459, %v1430, %v831
      %v1462 = vsel %vm1459, %v1431, %v833
      %v1463 = vsel %vm1459, %v1432, %v835
      %v1464 = vsel %vm1459, %v1429, %v837
      %v1465 = vsel %vm1459, %v1430, %v839
      %v1466 = vsel %vm1459, %v1433, %v841
      %v1467 = vsel %vm1459, %v1434, %v843
      %v1468 = vsel %vm1459, %v1435, %v845
      %v1469 = vsel %vm1459, %v1436, %v847
      %v1470 = vsel %vm1459, %v1437, %v849
      %v1471 = vsel %vm1459, %v1438, %v851
      %v1472 = vsel %vm1459, %v1439, %v853
      %v1473 = vsel %vm1459, %v1440, %v855
      %v1474 = vsel %vm1459, %v1441, %v857
      %v1475 = vsel %vm1459, %v1442, %v859
      %v1476 = vsel %vm1459, %v1443, %v861
      %v1477 = vsel %vm1459, %v1444, %v863
      %v1478 = vsel %vm1459, %v1445, %v865
      %v1479 = vsel %vm1459, %v1446, %v867
      %v1480 = vsel %vm1459, %v1447, %v869
      %v1481 = vsel %vm1459, %v1448, %v871
      %v1482 = vsel %vm1459, %v1449, %v873
      %v1483 = vsel %vm1459, %v1450, %v875
      %v1484 = vsel %vm1459, %v1451, %v877
      %v1485 = vsel %vm1459, %v1452, %v879
      %v1486 = vsel %vm1459, %v1453, %v881
      %v1487 = vsel %vm1459, %v1454, %v883
      %v1488 = vsel %vm1459, %v1455, %v885
      %v1489 = vsel %vm1459, %v1456, %v887
      %v1490 = vsel %vm1459, %v1457, %v889
      %v1491 = vsel %vm1459, %v1458, %v891
      %vm1492 = vcmask 130048
      %v1493 = vsel %vm1492, %v1460, %v931
      %v1494 = vsel %vm1492, %v1461, %v933
      %v1495 = vsel %vm1492, %v1462, %v935
      %v1496 = vsel %vm1492, %v1463, %v937
      %v1497 = vsel %vm1492, %v1464, %v939
      %v1498 = vsel %vm1492, %v1465, %v941
      %v1499 = vsel %vm1492, %v1466, %v943
      %v1500 = vsel %vm1492, %v1467, %v945
      %v1501 = vsel %vm1492, %v1468, %v947
      %v1502 = vsel %vm1492, %v1469, %v949
      %v1503 = vsel %vm1492, %v1470, %v951
      %v1504 = vsel %vm1492, %v1471, %v953
      %v1505 = vsel %vm1492, %v1472, %v955
      %v1506 = vsel %vm1492, %v1473, %v957
      %v1507 = vsel %vm1492, %v1474, %v959
      %v1508 = vsel %vm1492, %v1475, %v961
      %v1509 = vsel %vm1492, %v1476, %v963
      %v1510 = vsel %vm1492, %v1477, %v965
      %v1511 = vsel %vm1492, %v1478, %v967
      %v1512 = vsel %vm1492, %v1479, %v969
      %v1513 = vsel %vm1492, %v1480, %v971
      %v1514 = vsel %vm1492, %v1481, %v973
      %v1515 = vsel %vm1492, %v1482, %v975
      %v1516 = vsel %vm1492, %v1483, %v977
      %v1517 = vsel %vm1492, %v1484, %v979
      %v1518 = vsel %vm1492, %v1485, %v981
      %v1519 = vsel %vm1492, %v1486, %v983
      %v1520 = vsel %vm1492, %v1487, %v985
      %v1521 = vsel %vm1492, %v1488, %v987
      %v1522 = vsel %vm1492, %v1489, %v989
      %v1523 = vsel %vm1492, %v1490, %v991
      %v1524 = vsel %vm1492, %v1491, %v993
      %vm1525 = vcmask 162816
      %v1526 = vsel %vm1525, %v1493, %v1032
      %v1527 = vsel %vm1525, %v1494, %v1034
      %v1528 = vsel %vm1525, %v1495, %v1036
      %v1529 = vsel %vm1525, %v1496, %v1038
      %v1530 = vsel %vm1525, %v1497, %v1040
      %v1531 = vsel %vm1525, %v1498, %v1042
      %v1532 = vsel %vm1525, %v1499, %v1044
      %v1533 = vsel %vm1525, %v1500, %v1046
      %v1534 = vsel %vm1525, %v1501, %v1048
      %v1535 = vsel %vm1525, %v1502, %v1050
      %v1536 = vsel %vm1525, %v1503, %v1052
      %v1537 = vsel %vm1525, %v1504, %v1054
      %v1538 = vsel %vm1525, %v1505, %v1056
      %v1539 = vsel %vm1525, %v1506, %v1058
      %v1540 = vsel %vm1525, %v1507, %v1060
      %v1541 = vsel %vm1525, %v1508, %v1062
      %v1542 = vsel %vm1525, %v1509, %v1064
      %v1543 = vsel %vm1525, %v1510, %v1066
      %v1544 = vsel %vm1525, %v1511, %v1068
      %v1545 = vsel %vm1525, %v1512, %v1070
      %v1546 = vsel %vm1525, %v1513, %v1072
      %v1547 = vsel %vm1525, %v1514, %v1074
      %v1548 = vsel %vm1525, %v1515, %v1076
      %v1549 = vsel %vm1525, %v1516, %v1078
      %v1550 = vsel %vm1525, %v1517, %v1080
      %v1551 = vsel %vm1525, %v1518, %v1082
      %v1552 = vsel %vm1525, %v1519, %v1084
      %v1553 = vsel %vm1525, %v1520, %v1086
      %v1554 = vsel %vm1525, %v1521, %v1088
      %v1555 = vsel %vm1525, %v1522, %v1090
      %v1556 = vsel %vm1525, %v1523, %v1092
      %v1557 = vsel %vm1525, %v1524, %v1094
      %vm1558 = vcmask 195584
      %v1559 = vsel %vm1558, %v1526, %v1128
      %v1560 = vsel %vm1558, %v1527, %v1130
      %v1561 = vsel %vm1558, %v1528, %v1132
      %v1562 = vsel %vm1558, %v1529, %v1134
      %v1563 = vsel %vm1558, %v1530, %v1136
      %v1564 = vsel %vm1558, %v1531, %v1138
      %v1565 = vsel %vm1558, %v1532, %v1140
      %v1566 = vsel %vm1558, %v1533, %v1142
      %v1567 = vsel %vm1558, %v1534, %v1144
      %v1568 = vsel %vm1558, %v1535, %v1146
      %v1569 = vsel %vm1558, %v1536, %v1148
      %v1570 = vsel %vm1558, %v1537, %v1150
      %v1571 = vsel %vm1558, %v1538, %v1152
      %v1572 = vsel %vm1558, %v1539, %v1154
      %v1573 = vsel %vm1558, %v1540, %v1156
      %v1574 = vsel %vm1558, %v1541, %v1158
      %v1575 = vsel %vm1558, %v1542, %v1160
      %v1576 = vsel %vm1558, %v1543, %v1162
      %v1577 = vsel %vm1558, %v1544, %v1164
      %v1578 = vsel %vm1558, %v1545, %v1166
      %v1579 = vsel %vm1558, %v1546, %v1168
      %v1580 = vsel %vm1558, %v1547, %v1170
      %v1581 = vsel %vm1558, %v1548, %v1172
      %v1582 = vsel %vm1558, %v1549, %v1174
      %v1583 = vsel %vm1558, %v1550, %v1176
      %v1584 = vsel %vm1558, %v1551, %v1178
      %v1585 = vsel %vm1558, %v1552, %v1180
      %v1586 = vsel %vm1558, %v1553, %v1182
      %v1587 = vsel %vm1558, %v1554, %v1184
      %v1588 = vsel %vm1558, %v1555, %v1186
      %v1589 = vsel %vm1558, %v1556, %v1180
      %v1590 = vsel %vm1558, %v1557, %v1182
      %vm1591 = vcmask 228352
      %v1592 = vsel %vm1591, %v1559, %v1218
      %v1593 = vsel %vm1591, %v1560, %v1220
      %v1594 = vsel %vm1591, %v1561, %v1222
      %v1595 = vsel %vm1591, %v1562, %v1224
      %v1596 = vsel %vm1591, %v1563, %v1226
      %v1597 = vsel %vm1591, %v1564, %v1228
      %v1598 = vsel %vm1591, %v1565, %v1230
      %v1599 = vsel %vm1591, %v1566, %v1232
      %v1600 = vsel %vm1591, %v1567, %v1234
      %v1601 = vsel %vm1591, %v1568, %v1236
      %v1602 = vsel %vm1591, %v1569, %v1238
      %v1603 = vsel %vm1591, %v1570, %v1240
      %v1604 = vsel %vm1591, %v1571, %v1242
      %v1605 = vsel %vm1591, %v1572, %v1244
      %v1606 = vsel %vm1591, %v1573, %v1246
      %v1607 = vsel %vm1591, %v1574, %v1248
      %v1608 = vsel %vm1591, %v1575, %v1250
      %v1609 = vsel %vm1591, %v1576, %v1252
      %v1610 = vsel %vm1591, %v1577, %v1254
      %v1611 = vsel %vm1591, %v1578, %v1256
      %v1612 = vsel %vm1591, %v1579, %v1258
      %v1613 = vsel %vm1591, %v1580, %v1260
      %v1614 = vsel %vm1591, %v1581, %v1262
      %v1615 = vsel %vm1591, %v1582, %v1264
      %v1616 = vsel %vm1591, %v1583, %v1266
      %v1617 = vsel %vm1591, %v1584, %v1268
      %v1618 = vsel %vm1591, %v1585, %v1270
      %v1619 = vsel %vm1591, %v1586, %v1272
      %v1620 = vsel %vm1591, %v1587, %v1274
      %v1621 = vsel %vm1591, %v1588, %v1276
      %v1622 = vsel %vm1591, %v1589, %v1270
      %v1623 = vsel %vm1591, %v1590, %v1272
      %vm1624 = vcmask 261120
      %v1625 = vsel %vm1624, %v1592, %v1308
      %v1626 = vsel %vm1624, %v1593, %v1310
      %v1627 = vsel %vm1624, %v1594, %v1312
      %v1628 = vsel %vm1624, %v1595, %v1314
      %v1629 = vsel %vm1624, %v1596, %v1316
      %v1630 = vsel %vm1624, %v1597, %v1318
      %v1631 = vsel %vm1624, %v1598, %v1320
      %v1632 = vsel %vm1624, %v1599, %v1322
      %v1633 = vsel %vm1624, %v1600, %v1324
      %v1634 = vsel %vm1624, %v1601, %v1326
      %v1635 = vsel %vm1624, %v1602, %v1328
      %v1636 = vsel %vm1624, %v1603, %v1330
      %v1637 = vsel %vm1624, %v1604, %v1332
      %v1638 = vsel %vm1624, %v1605, %v1334
      %v1639 = vsel %vm1624, %v1606, %v1336
      %v1640 = vsel %vm1624, %v1607, %v1338
      %v1641 = vsel %vm1624, %v1608, %v1340
      %v1642 = vsel %vm1624, %v1609, %v1342
      %v1643 = vsel %vm1624, %v1610, %v1344
      %v1644 = vsel %vm1624, %v1611, %v1346
      %v1645 = vsel %vm1624, %v1612, %v1348
      %v1646 = vsel %vm1624, %v1613, %v1350
      %v1647 = vsel %vm1624, %v1614, %v1352
      %v1648 = vsel %vm1624, %v1615, %v1354
      %v1649 = vsel %vm1624, %v1616, %v1356
      %v1650 = vsel %vm1624, %v1617, %v1358
      %v1651 = vsel %vm1624, %v1618, %v1360
      %v1652 = vsel %vm1624, %v1619, %v1362
      %v1653 = vsel %vm1624, %v1620, %v1364
      %v1654 = vsel %vm1624, %v1621, %v1366
      %v1655 = vsel %vm1624, %v1622, %v1360
      %v1656 = vsel %vm1624, %v1623, %v1362
      %v1657 = vld [vmem:[%s1] sm:$0xff]
      %v1658 = vld [vmem:[%s1 + $0x8] sm:$0xff]
      %v1659 = vld [vmem:[%s1 + $0x10] sm:$0xff]
      %v1660 = vld [vmem:[%s1 + $0x18] sm:$0xff]
      %v1661 = vld [vmem:[%s1 + $0x20] sm:$0xf]
      %v1662 = vld [vmem:[%s2] sm:$0x1]
      %v1664 = vlaneseq
      %v1665 = vshrl.u32 %v1664, 7
      %v1666 = vsub.s32 0, %v1665
      %v1667 = vrot.slane %v1662, %v1666
      %vm1669 = vcmask 293888
      %v1671 = vsel %vm1669, %v1625, 0
      %v1674 = vsel %vm1669, %v1626, 0
      %v1677 = vsel %vm1669, %v1627, 0
      %v1680 = vsel %vm1669, %v1628, 0
      %v1683 = vsel %vm1669, %v1629, 0
      %v1686 = vsel %vm1669, %v1630, 0
      %v1689 = vsel %vm1669, %v1631, 0
      %v1692 = vsel %vm1669, %v1632, 0
      %v1695 = vsel %vm1669, %v1633, 0
      %v1698 = vsel %vm1669, %v1634, 0
      %v1701 = vsel %vm1669, %v1635, 0
      %v1704 = vsel %vm1669, %v1636, 0
      %v1707 = vsel %vm1669, %v1637, 0
      %v1710 = vsel %vm1669, %v1638, 0
      %v1713 = vsel %vm1669, %v1639, 0
      %v1716 = vsel %vm1669, %v1640, 0
      %v1719 = vsel %vm1669, %v1641, 0
      %v1722 = vsel %vm1669, %v1642, 0
      %v1725 = vsel %vm1669, %v1643, 0
      %v1728 = vsel %vm1669, %v1644, 0
      %v1731 = vsel %vm1669, %v1645, 0
      %v1734 = vsel %vm1669, %v1646, 0
      %v1737 = vsel %vm1669, %v1647, 0
      %v1740 = vsel %vm1669, %v1648, 0
      %v1743 = vsel %vm1669, %v1649, 0
      %v1746 = vsel %vm1669, %v1650, 0
      %v1749 = vsel %vm1669, %v1651, 0
      %v1752 = vsel %vm1669, %v1652, 0
      %v1755 = vsel %vm1669, %v1653, 0
      %v1758 = vsel %vm1669, %v1654, 0
      %v1761 = vsel %vm1669, %v1655, 0
      %v1764 = vsel %vm1669, %v1656, 0
      %vm1766 = vcmask 1043456
      %v1768 = vsel %vm1766, %v1661, 0
      %1770 = vmatprep.subr.mxu0 0.0
      %1771 = vmatpush1.msra.mxu0 0.0
      %1772 = vmatprep.subr.mxu0 0.0
      %1773 = vmatpush1.msra.mxu0 0.0
      %1774 = vmatprep.subr.mxu0 0.0
      %1775 = vmatpush1.msra.mxu0 0.0
      %1776 = vmatprep.subr.mxu0 0.0
      %1777 = vmatpush1.msra.mxu0 0.0
      %1778 = vmatprep.subr.mxu0 0.0
      %1779 = vmatpush1.msra.mxu0 0.0
      %1780 = vmatprep.subr.mxu0 0.0
      %1781 = vmatpush1.msra.mxu0 0.0
      %1782 = vmatprep.subr.mxu0 0.0
      %1783 = vmatpush1.msra.mxu0 0.0
      %1784 = vmatprep.subr.mxu0 0.0
      %1785 = vmatpush1.msra.mxu0 0.0
      %1786 = vmatprep.subr.mxu0 0.0
      %1787 = vmatpush1.msra.mxu0 0.0
      %1788 = vmatprep.subr.mxu0 0.0
      %1789 = vmatpush1.msra.mxu0 0.0
      %1790 = vmatprep.subr.mxu0 0.0
      %1791 = vmatpush1.msra.mxu0 0.0
      %1792 = vmatprep.subr.mxu0 0.0
      %1793 = vmatpush1.msra.mxu0 %v1768
      %1794 = vmatprep.subr.mxu0 0.0
      %1795 = vmatpush1.msra.mxu0 %v1660
      %1796 = vmatprep.subr.mxu0 0.0
      %1797 = vmatpush1.msra.mxu0 %v1659
      %1798 = vmatprep.subr.mxu0 0.0
      %1799 = vmatpush1.msra.mxu0 %v1658
      %1800 = vmatprep.subr.mxu0 0.0
      %1801 = vmatpush1.msra.mxu0 %v1657
      %1802 = vmatprep.subr.mxu0 0.0
      %1803 = vmatpush2.msra.mxu0 0.0
      %1804 = vmatprep.subr.mxu0 0.0
      %1805 = vmatpush2.msra.mxu0 0.0
      %1806 = vmatprep.subr.mxu0 0.0
      %1807 = vmatpush2.msra.mxu0 0.0
      %1808 = vmatprep.subr.mxu0 0.0
      %1809 = vmatpush2.msra.mxu0 0.0
      %1810 = vmatprep.subr.mxu0 0.0
      %1811 = vmatpush2.msra.mxu0 0.0
      %1812 = vmatprep.subr.mxu0 0.0
      %1813 = vmatpush2.msra.mxu0 0.0
      %1814 = vmatprep.subr.mxu0 0.0
      %1815 = vmatpush2.msra.mxu0 0.0
      %1816 = vmatprep.subr.mxu0 0.0
      %1817 = vmatpush2.msra.mxu0 0.0
      %1818 = vmatprep.subr.mxu0 0.0
      %1819 = vmatpush2.msra.mxu0 0.0
      %1820 = vmatprep.subr.mxu0 0.0
      %1821 = vmatpush2.msra.mxu0 0.0
      %1822 = vmatprep.subr.mxu0 0.0
      %1823 = vmatpush2.msra.mxu0 0.0
      %1824 = vmatprep.subr.mxu0 0.0
      %1825 = vmatpush2.msra.mxu0 0.0
      %1826 = vmatprep.subr.mxu0 0.0
      %1827 = vmatpush2.msra.mxu0 0.0
      %1828 = vmatprep.subr.mxu0 0.0
      %1829 = vmatpush2.msra.mxu0 0.0
      %1830 = vmatprep.subr.mxu0 0.0
      %1831 = vmatpush2.msra.mxu0 0.0
      %1832 = vmatprep.subr.mxu0 0.0
      %1833 = vmatpush2.msra.mxu0 0.0
      %1834 = vmatprep.mubr.f32.mxu0 0.0
      %1835 = vmatmul.mubr.f32.gmra.mxu0 %v1671
      %v1836 = vpop.f32.mrf.mxu0
      %v1837 = vadd.f32 %v1667, %v1836
      %v1838 = vpop.f32.mrf.mxu0
      %1839 = vmatprep.mubr.f32.mxu0 0.0
      %1840 = vmatmul.mubr.f32.gmra.mxu0 %v1674
      %v1841 = vpop.f32.mrf.mxu0
      %v1842 = vadd.f32 %v1667, %v1841
      %v1843 = vpop.f32.mrf.mxu0
      %1844 = vmatprep.mubr.f32.mxu0 0.0
      %1845 = vmatmul.mubr.f32.gmra.mxu0 %v1677
      %v1846 = vpop.f32.mrf.mxu0
      %v1847 = vadd.f32 %v1667, %v1846
      %v1848 = vpop.f32.mrf.mxu0
      %1849 = vmatprep.mubr.f32.mxu0 0.0
      %1850 = vmatmul.mubr.f32.gmra.mxu0 %v1680
      %v1851 = vpop.f32.mrf.mxu0
      %v1852 = vadd.f32 %v1667, %v1851
      %v1853 = vpop.f32.mrf.mxu0
      %1854 = vmatprep.mubr.f32.mxu0 0.0
      %1855 = vmatmul.mubr.f32.gmra.mxu0 %v1683
      %v1856 = vpop.f32.mrf.mxu0
      %v1857 = vadd.f32 %v1667, %v1856
      %v1858 = vpop.f32.mrf.mxu0
      %1859 = vmatprep.mubr.f32.mxu0 0.0
      %1860 = vmatmul.mubr.f32.gmra.mxu0 %v1686
      %v1861 = vpop.f32.mrf.mxu0
      %v1862 = vadd.f32 %v1667, %v1861
      %v1863 = vpop.f32.mrf.mxu0
      %1864 = vmatprep.mubr.f32.mxu0 0.0
      %1865 = vmatmul.mubr.f32.gmra.mxu0 %v1689
      %v1866 = vpop.f32.mrf.mxu0
      %v1867 = vadd.f32 %v1667, %v1866
      %v1868 = vpop.f32.mrf.mxu0
      %1869 = vmatprep.mubr.f32.mxu0 0.0
      %1870 = vmatmul.mubr.f32.gmra.mxu0 %v1692
      %v1871 = vpop.f32.mrf.mxu0
      %v1872 = vadd.f32 %v1667, %v1871
      %v1873 = vpop.f32.mrf.mxu0
      %1874 = vmatprep.mubr.f32.mxu0 0.0
      %1875 = vmatmul.mubr.f32.gmra.mxu0 %v1695
      %v1876 = vpop.f32.mrf.mxu0
      %v1877 = vadd.f32 %v1667, %v1876
      %v1878 = vpop.f32.mrf.mxu0
      %1879 = vmatprep.mubr.f32.mxu0 0.0
      %1880 = vmatmul.mubr.f32.gmra.mxu0 %v1698
      %v1881 = vpop.f32.mrf.mxu0
      %v1882 = vadd.f32 %v1667, %v1881
      %v1883 = vpop.f32.mrf.mxu0
      %1884 = vmatprep.mubr.f32.mxu0 0.0
      %1885 = vmatmul.mubr.f32.gmra.mxu0 %v1701
      %v1886 = vpop.f32.mrf.mxu0
      %v1887 = vadd.f32 %v1667, %v1886
      %v1888 = vpop.f32.mrf.mxu0
      %1889 = vmatprep.mubr.f32.mxu0 0.0
      %1890 = vmatmul.mubr.f32.gmra.mxu0 %v1704
      %v1891 = vpop.f32.mrf.mxu0
      %v1892 = vadd.f32 %v1667, %v1891
      %v1893 = vpop.f32.mrf.mxu0
      %1894 = vmatprep.mubr.f32.mxu0 0.0
      %1895 = vmatmul.mubr.f32.gmra.mxu0 %v1707
      %v1896 = vpop.f32.mrf.mxu0
      %v1897 = vadd.f32 %v1667, %v1896
      %v1898 = vpop.f32.mrf.mxu0
      %1899 = vmatprep.mubr.f32.mxu0 0.0
      %1900 = vmatmul.mubr.f32.gmra.mxu0 %v1710
      %v1901 = vpop.f32.mrf.mxu0
      %v1902 = vadd.f32 %v1667, %v1901
      %v1903 = vpop.f32.mrf.mxu0
      %1904 = vmatprep.mubr.f32.mxu0 0.0
      %1905 = vmatmul.mubr.f32.gmra.mxu0 %v1713
      %v1906 = vpop.f32.mrf.mxu0
      %v1907 = vadd.f32 %v1667, %v1906
      %v1908 = vpop.f32.mrf.mxu0
      %1909 = vmatprep.mubr.f32.mxu0 0.0
      %1910 = vmatmul.mubr.f32.gmra.mxu0 %v1716
      %v1911 = vpop.f32.mrf.mxu0
      %v1912 = vadd.f32 %v1667, %v1911
      %v1913 = vpop.f32.mrf.mxu0
      %1914 = vmatprep.mubr.f32.mxu0 0.0
      %1915 = vmatmul.mubr.f32.gmra.mxu0 %v1719
      %v1916 = vpop.f32.mrf.mxu0
      %v1917 = vadd.f32 %v1667, %v1916
      %v1918 = vpop.f32.mrf.mxu0
      %1919 = vmatprep.mubr.f32.mxu0 0.0
      %1920 = vmatmul.mubr.f32.gmra.mxu0 %v1722
      %v1921 = vpop.f32.mrf.mxu0
      %v1922 = vadd.f32 %v1667, %v1921
      %v1923 = vpop.f32.mrf.mxu0
      %1924 = vmatprep.mubr.f32.mxu0 0.0
      %1925 = vmatmul.mubr.f32.gmra.mxu0 %v1725
      %v1926 = vpop.f32.mrf.mxu0
      %v1927 = vadd.f32 %v1667, %v1926
      %v1928 = vpop.f32.mrf.mxu0
      %1929 = vmatprep.mubr.f32.mxu0 0.0
      %1930 = vmatmul.mubr.f32.gmra.mxu0 %v1728
      %v1931 = vpop.f32.mrf.mxu0
      %v1932 = vadd.f32 %v1667, %v1931
      %v1933 = vpop.f32.mrf.mxu0
      %1934 = vmatprep.mubr.f32.mxu0 0.0
      %1935 = vmatmul.mubr.f32.gmra.mxu0 %v1731
      %v1936 = vpop.f32.mrf.mxu0
      %v1937 = vadd.f32 %v1667, %v1936
      %v1938 = vpop.f32.mrf.mxu0
      %1939 = vmatprep.mubr.f32.mxu0 0.0
      %1940 = vmatmul.mubr.f32.gmra.mxu0 %v1734
      %v1941 = vpop.f32.mrf.mxu0
      %v1942 = vadd.f32 %v1667, %v1941
      %v1943 = vpop.f32.mrf.mxu0
      %1944 = vmatprep.mubr.f32.mxu0 0.0
      %1945 = vmatmul.mubr.f32.gmra.mxu0 %v1737
      %v1946 = vpop.f32.mrf.mxu0
      %v1947 = vadd.f32 %v1667, %v1946
      %v1948 = vpop.f32.mrf.mxu0
      %1949 = vmatprep.mubr.f32.mxu0 0.0
      %1950 = vmatmul.mubr.f32.gmra.mxu0 %v1740
      %v1951 = vpop.f32.mrf.mxu0
      %v1952 = vadd.f32 %v1667, %v1951
      %v1953 = vpop.f32.mrf.mxu0
      %1954 = vmatprep.mubr.f32.mxu0 0.0
      %1955 = vmatmul.mubr.f32.gmra.mxu0 %v1743
      %v1956 = vpop.f32.mrf.mxu0
      %v1957 = vadd.f32 %v1667, %v1956
      %v1958 = vpop.f32.mrf.mxu0
      %1959 = vmatprep.mubr.f32.mxu0 0.0
      %1960 = vmatmul.mubr.f32.gmra.mxu0 %v1746
      %v1961 = vpop.f32.mrf.mxu0
      %v1962 = vadd.f32 %v1667, %v1961
      %v1963 = vpop.f32.mrf.mxu0
      %1964 = vmatprep.mubr.f32.mxu0 0.0
      %1965 = vmatmul.mubr.f32.gmra.mxu0 %v1749
      %v1966 = vpop.f32.mrf.mxu0
      %v1967 = vadd.f32 %v1667, %v1966
      %v1968 = vpop.f32.mrf.mxu0
      %1969 = vmatprep.mubr.f32.mxu0 0.0
      %1970 = vmatmul.mubr.f32.gmra.mxu0 %v1752
      %v1971 = vpop.f32.mrf.mxu0
      %v1972 = vadd.f32 %v1667, %v1971
      %v1973 = vpop.f32.mrf.mxu0
      %1974 = vmatprep.mubr.f32.mxu0 0.0
      %1975 = vmatmul.mubr.f32.gmra.mxu0 %v1755
      %v1976 = vpop.f32.mrf.mxu0
      %v1977 = vadd.f32 %v1667, %v1976
      %v1978 = vpop.f32.mrf.mxu0
      %1979 = vmatprep.mubr.f32.mxu0 0.0
      %1980 = vmatmul.mubr.f32.gmra.mxu0 %v1758
      %v1981 = vpop.f32.mrf.mxu0
      %v1982 = vadd.f32 %v1667, %v1981
      %v1983 = vpop.f32.mrf.mxu0
      %1984 = vmatprep.mubr.f32.mxu0 0.0
      %1985 = vmatmul.mubr.f32.gmra.mxu0 %v1761
      %v1986 = vpop.f32.mrf.mxu0
      %v1987 = vadd.f32 %v1667, %v1986
      %v1988 = vpop.f32.mrf.mxu0
      %1989 = vmatprep.mubr.f32.mxu0 0.0
      %1990 = vmatmul.mubr.f32.gmra.mxu0 %v1764
      %v1991 = vpop.f32.mrf.mxu0
      %v1992 = vadd.f32 %v1667, %v1991
      %v1993 = vpop.f32.mrf.mxu0
      %1994 = vdwg.mxu0
      %1995 = vst.msk [vmem:[%s204] sm:$0xff] %vm1428, %v1837
      %1996 = vst.msk [vmem:[%s204 + $0x8] sm:$0xff] %vm1428, %v1842
      %1997 = vst.msk [vmem:[%s204 + $0x10] sm:$0xff] %vm1428, %v1847
      %1998 = vst.msk [vmem:[%s204 + $0x18] sm:$0xff] %vm1428, %v1852
      %1999 = vst.msk [vmem:[%s204 + $0x20] sm:$0xff] %vm1428, %v1857
      %2000 = vst.msk [vmem:[%s204 + $0x28] sm:$0xff] %vm1428, %v1862
      %2001 = vst.msk [vmem:[%s204 + $0x30] sm:$0xff] %vm1428, %v1867
      %2002 = vst.msk [vmem:[%s204 + $0x38] sm:$0xff] %vm1428, %v1872
      %2003 = vst.msk [vmem:[%s204 + $0x40] sm:$0xff] %vm1428, %v1877
      %2004 = vst.msk [vmem:[%s204 + $0x48] sm:$0xff] %vm1428, %v1882
      %2005 = vst.msk [vmem:[%s204 + $0x50] sm:$0xff] %vm1428, %v1887
      %2006 = vst.msk [vmem:[%s204 + $0x58] sm:$0xff] %vm1428, %v1892
      %2007 = vst.msk [vmem:[%s204 + $0x60] sm:$0xff] %vm1428, %v1897
      %2008 = vst.msk [vmem:[%s204 + $0x68] sm:$0xff] %vm1428, %v1902
      %2009 = vst.msk [vmem:[%s204 + $0x70] sm:$0xff] %vm1428, %v1907
      %2010 = vst.msk [vmem:[%s204 + $0x78] sm:$0xff] %vm1428, %v1912
      %2011 = vst.msk [vmem:[%s204 + $0x80] sm:$0xff] %vm1428, %v1917
      %2012 = vst.msk [vmem:[%s204 + $0x88] sm:$0xff] %vm1428, %v1922
      %2013 = vst.msk [vmem:[%s204 + $0x90] sm:$0xff] %vm1428, %v1927
      %2014 = vst.msk [vmem:[%s204 + $0x98] sm:$0xff] %vm1428, %v1932
      %2015 = vst.msk [vmem:[%s204 + $0xa0] sm:$0xff] %vm1428, %v1937
      %2016 = vst.msk [vmem:[%s204 + $0xa8] sm:$0xff] %vm1428, %v1942
      %2017 = vst.msk [vmem:[%s204 + $0xb0] sm:$0xff] %vm1428, %v1947
      %2018 = vst.msk [vmem:[%s204 + $0xb8] sm:$0xff] %vm1428, %v1952
      %2019 = vst.msk [vmem:[%s204 + $0xc0] sm:$0xff] %vm1428, %v1957
      %2020 = vst.msk [vmem:[%s204 + $0xc8] sm:$0xff] %vm1428, %v1962
      %2021 = vst.msk [vmem:[%s204 + $0xd0] sm:$0xff] %vm1428, %v1967
      %2022 = vst.msk [vmem:[%s204 + $0xd8] sm:$0xff] %vm1428, %v1972
      %2023 = vst.msk [vmem:[%s204 + $0xe0] sm:$0xff] %vm1428, %v1977
      %2024 = vst.msk [vmem:[%s204 + $0xe8] sm:$0xff] %vm1428, %v1982
      %2025 = vst.msk [vmem:[%s204 + $0xf0] sm:$0xff] %vm1428, %v1987
      %2026 = vst.msk [vmem:[%s204 + $0xf8] sm:$0xff] %vm1428, %v1992
      %v2027 = vsel %vm1428, %v1837, 0.0
      %v2028 = vsel %vm1428, %v1842, 0.0
      %v2029 = vadd.f32 %v2027, %v2028
      %v2030 = vsel %vm1428, %v1847, 0.0
      %v2031 = vadd.f32 %v2029, %v2030
      %v2032 = vsel %vm1428, %v1852, 0.0
      %v2033 = vadd.f32 %v2031, %v2032
      %v2034 = vsel %vm1428, %v1857, 0.0
      %v2035 = vadd.f32 %v2033, %v2034
      %v2036 = vsel %vm1428, %v1862, 0.0
      %v2037 = vadd.f32 %v2035, %v2036
      %v2038 = vsel %vm1428, %v1867, 0.0
      %v2039 = vadd.f32 %v2037, %v2038
      %v2040 = vsel %vm1428, %v1872, 0.0
      %v2041 = vadd.f32 %v2039, %v2040
      %v2042 = vsel %vm1428, %v1877, 0.0
      %v2043 = vadd.f32 %v2041, %v2042
      %v2044 = vsel %vm1428, %v1882, 0.0
      %v2045 = vadd.f32 %v2043, %v2044
      %v2046 = vsel %vm1428, %v1887, 0.0
      %v2047 = vadd.f32 %v2045, %v2046
      %v2048 = vsel %vm1428, %v1892, 0.0
      %v2049 = vadd.f32 %v2047, %v2048
      %v2050 = vsel %vm1428, %v1897, 0.0
      %v2051 = vadd.f32 %v2049, %v2050
      %v2052 = vsel %vm1428, %v1902, 0.0
      %v2053 = vadd.f32 %v2051, %v2052
      %v2054 = vsel %vm1428, %v1907, 0.0
      %v2055 = vadd.f32 %v2053, %v2054
      %v2056 = vsel %vm1428, %v1912, 0.0
      %v2057 = vadd.f32 %v2055, %v2056
      %v2058 = vsel %vm1428, %v1917, 0.0
      %v2059 = vadd.f32 %v2057, %v2058
      %v2060 = vsel %vm1428, %v1922, 0.0
      %v2061 = vadd.f32 %v2059, %v2060
      %v2062 = vsel %vm1428, %v1927, 0.0
      %v2063 = vadd.f32 %v2061, %v2062
      %v2064 = vsel %vm1428, %v1932, 0.0
      %v2065 = vadd.f32 %v2063, %v2064
      %v2066 = vsel %vm1428, %v1937, 0.0
      %v2067 = vadd.f32 %v2065, %v2066
      %v2068 = vsel %vm1428, %v1942, 0.0
      %v2069 = vadd.f32 %v2067, %v2068
      %v2070 = vsel %vm1428, %v1947, 0.0
      %v2071 = vadd.f32 %v2069, %v2070
      %v2072 = vsel %vm1428, %v1952, 0.0
      %v2073 = vadd.f32 %v2071, %v2072
      %v2074 = vsel %vm1428, %v1957, 0.0
      %v2075 = vadd.f32 %v2073, %v2074
      %v2076 = vsel %vm1428, %v1962, 0.0
      %v2077 = vadd.f32 %v2075, %v2076
      %v2078 = vsel %vm1428, %v1967, 0.0
      %v2079 = vadd.f32 %v2077, %v2078
      %v2080 = vsel %vm1428, %v1972, 0.0
      %v2081 = vadd.f32 %v2079, %v2080
      %v2082 = vsel %vm1428, %v1977, 0.0
      %v2083 = vadd.f32 %v2081, %v2082
      %v2084 = vsel %vm1428, %v1982, 0.0
      %v2085 = vadd.f32 %v2083, %v2084
      %v2086 = vsel %vm1428, %v1987, 0.0
      %v2087 = vadd.f32 %v2085, %v2086
      %v2088 = vsel %vm1428, %v1992, 0.0
      %v2089 = vadd.f32 %v2087, %v2088
      %v2090 = vrot.slane %v2089, 4
      %v2091 = vadd.f32 %v2089, %v2090
      %v2092 = vrot.slane %v2091, 2
      %v2093 = vadd.f32 %v2091, %v2092
      %v2094 = vrot.slane %v2093, 1
      %v2095 = vadd.f32 %v2093, %v2094
      %v2096 = vmul.f32 %v1837, %v1837
      %v2097 = vmul.f32 %v1842, %v1842
      %v2098 = vmul.f32 %v1847, %v1847
      %v2099 = vmul.f32 %v1852, %v1852
      %v2100 = vmul.f32 %v1857, %v1857
      %v2101 = vmul.f32 %v1862, %v1862
      %v2102 = vmul.f32 %v1867, %v1867
      %v2103 = vmul.f32 %v1872, %v1872
      %v2104 = vmul.f32 %v1877, %v1877
      %v2105 = vmul.f32 %v1882, %v1882
      %v2106 = vmul.f32 %v1887, %v1887
      %v2107 = vmul.f32 %v1892, %v1892
      %v2108 = vmul.f32 %v1897, %v1897
      %v2109 = vmul.f32 %v1902, %v1902
      %v2110 = vmul.f32 %v1907, %v1907
      %v2111 = vmul.f32 %v1912, %v1912
      %v2112 = vmul.f32 %v1917, %v1917
      %v2113 = vmul.f32 %v1922, %v1922
      %v2114 = vmul.f32 %v1927, %v1927
      %v2115 = vmul.f32 %v1932, %v1932
      %v2116 = vmul.f32 %v1937, %v1937
      %v2117 = vmul.f32 %v1942, %v1942
      %v2118 = vmul.f32 %v1947, %v1947
      %v2119 = vmul.f32 %v1952, %v1952
      %v2120 = vmul.f32 %v1957, %v1957
      %v2121 = vmul.f32 %v1962, %v1962
      %v2122 = vmul.f32 %v1967, %v1967
      %v2123 = vmul.f32 %v1972, %v1972
      %v2124 = vmul.f32 %v1977, %v1977
      %v2125 = vmul.f32 %v1982, %v1982
      %v2126 = vmul.f32 %v1987, %v1987
      %v2127 = vmul.f32 %v1992, %v1992
      %v2128 = vsel %vm1428, %v2096, 0.0
      %v2129 = vsel %vm1428, %v2097, 0.0
      %v2130 = vadd.f32 %v2128, %v2129
      %v2131 = vsel %vm1428, %v2098, 0.0
      %v2132 = vadd.f32 %v2130, %v2131
      %v2133 = vsel %vm1428, %v2099, 0.0
      %v2134 = vadd.f32 %v2132, %v2133
      %v2135 = vsel %vm1428, %v2100, 0.0
      %v2136 = vadd.f32 %v2134, %v2135
      %v2137 = vsel %vm1428, %v2101, 0.0
      %v2138 = vadd.f32 %v2136, %v2137
      %v2139 = vsel %vm1428, %v2102, 0.0
      %v2140 = vadd.f32 %v2138, %v2139
      %v2141 = vsel %vm1428, %v2103, 0.0
      %v2142 = vadd.f32 %v2140, %v2141
      %v2143 = vsel %vm1428, %v2104, 0.0
      %v2144 = vadd.f32 %v2142, %v2143
      %v2145 = vsel %vm1428, %v2105, 0.0
      %v2146 = vadd.f32 %v2144, %v2145
      %v2147 = vsel %vm1428, %v2106, 0.0
      %v2148 = vadd.f32 %v2146, %v2147
      %v2149 = vsel %vm1428, %v2107, 0.0
      %v2150 = vadd.f32 %v2148, %v2149
      %v2151 = vsel %vm1428, %v2108, 0.0
      %v2152 = vadd.f32 %v2150, %v2151
      %v2153 = vsel %vm1428, %v2109, 0.0
      %v2154 = vadd.f32 %v2152, %v2153
      %v2155 = vsel %vm1428, %v2110, 0.0
      %v2156 = vadd.f32 %v2154, %v2155
      %v2157 = vsel %vm1428, %v2111, 0.0
      %v2158 = vadd.f32 %v2156, %v2157
      %v2159 = vsel %vm1428, %v2112, 0.0
      %v2160 = vadd.f32 %v2158, %v2159
      %v2161 = vsel %vm1428, %v2113, 0.0
      %v2162 = vadd.f32 %v2160, %v2161
      %v2163 = vsel %vm1428, %v2114, 0.0
      %v2164 = vadd.f32 %v2162, %v2163
      %v2165 = vsel %vm1428, %v2115, 0.0
      %v2166 = vadd.f32 %v2164, %v2165
      %v2167 = vsel %vm1428, %v2116, 0.0
      %v2168 = vadd.f32 %v2166, %v2167
      %v2169 = vsel %vm1428, %v2117, 0.0
      %v2170 = vadd.f32 %v2168, %v2169
      %v2171 = vsel %vm1428, %v2118, 0.0
      %v2172 = vadd.f32 %v2170, %v2171
      %v2173 = vsel %vm1428, %v2119, 0.0
      %v2174 = vadd.f32 %v2172, %v2173
      %v2175 = vsel %vm1428, %v2120, 0.0
      %v2176 = vadd.f32 %v2174, %v2175
      %v2177 = vsel %vm1428, %v2121, 0.0
      %v2178 = vadd.f32 %v2176, %v2177
      %v2179 = vsel %vm1428, %v2122, 0.0
      %v2180 = vadd.f32 %v2178, %v2179
      %v2181 = vsel %vm1428, %v2123, 0.0
      %v2182 = vadd.f32 %v2180, %v2181
      %v2183 = vsel %vm1428, %v2124, 0.0
      %v2184 = vadd.f32 %v2182, %v2183
      %v2185 = vsel %vm1428, %v2125, 0.0
      %v2186 = vadd.f32 %v2184, %v2185
      %v2187 = vsel %vm1428, %v2126, 0.0
      %v2188 = vadd.f32 %v2186, %v2187
      %v2189 = vsel %vm1428, %v2127, 0.0
      %v2190 = vadd.f32 %v2188, %v2189
      %v2191 = vrot.slane %v2190, 4
      %v2192 = vadd.f32 %v2190, %v2191
      %v2193 = vrot.slane %v2192, 2
      %v2194 = vadd.f32 %v2192, %v2193
      %v2195 = vrot.slane %v2194, 1
      %v2196 = vadd.f32 %v2194, %v2195
      %v2197 = vsel %vm305, %v2095, %v2196
      %vm2198 = vcmask 58368
      %2199 = vst.msk [vmem:[%s208] sm:$0x3] %vm2198, %v2197
      %p2200 = scmp.lt.s32.totalorder %s16, 1
      %s2201 = scalar_select %p2200, %s16, 1
      %s2202 = smul.addr %s2201, 32
      %s2203 = smul.addr %s2202, 8
      %s2204 = scalar_lea.vmem %s3, %s2203
      %p2205 = scmp.lt.s32.totalorder %s16, 1
      %s2206 = scalar_select %p2205, %s16, 1
      %s2207 = smul.addr %s2206, 2
      %s2208 = scalar_lea.vmem %s4, %s2207
      // Predicated region
      $region33: #{conv_block.2} parent=31 // pred_check
        %p2209 = pneg %p102
      $region34: #{conv_block.2} parent=31 // pred_check_branch
        %2211 = sbr.rel (%p2209) target = $region36
      $region35: #{conv_block.2} parent=31 // pred_region
        _
      $region36: #{conv_block.2} parent=31 // pred_fallthru
        _
      // Predicated region
      $region37: #{conv_block.2} parent=31 // pred_check
        %p2212 = pneg %p128
      $region38: #{conv_block.2} parent=31 // pred_check_branch
        %2214 = sbr.rel (%p2212) target = $region40
      $region39: #{conv_block.2} parent=31 // pred_region
        _
      $region40: #{conv_block.2} parent=31 // pred_fallthru
        _
    $region32: #{conv_block.2} parent=5 // pred_fallthru
      _
    %p2215 = scmp.le.s32.totalorder 2, %s11
    // Predicated region
    $region41: #{conv_block.2} parent=5 // pred_check
      %p2216 = pneg %p2215
    $region42: #{conv_block.2} parent=5 // pred_check_branch
      %2218 = sbr.rel (%p2216) target = $region44
    $region43: #{conv_block.2} parent=5 // pred_region
      %s2219 = ssub.s32 %s11, 2
      // Predicated region
      $region45: #{conv_block.2} parent=43 // pred_check
        %p2220 = pneg %p108
      $region46: #{conv_block.2} parent=43 // pred_check_branch
        %2222 = sbr.rel (%p2220) target = $region48
      $region47: #{conv_block.2} parent=43 // pred_region
        %p2223 = scmp.lt.s32.totalorder %s17, 1
        %s2224 = scalar_select %p2223, %s17, 1
        %s2225 = smul.addr %s2224, 32
        %s2226 = smul.addr %s2225, 8
        %s2227 = scalar_lea.vmem %s3, %s2226
      $region48: #{conv_block.2} parent=43 // pred_fallthru
        _
      // Predicated region
      $region49: #{conv_block.2} parent=43 // pred_check
        %p2228 = pneg %p134
      $region50: #{conv_block.2} parent=43 // pred_check_branch
        %2230 = sbr.rel (%p2228) target = $region52
      $region51: #{conv_block.2} parent=43 // pred_region
        %p2231 = scmp.lt.s32.totalorder %s17, 1
        %s2232 = scalar_select %p2231, %s17, 1
        %s2233 = smul.addr %s2232, 2
        %s2234 = scalar_lea.vmem %s4, %s2233
      $region52: #{conv_block.2} parent=43 // pred_fallthru
        _
    $region44: #{conv_block.2} parent=5 // pred_fallthru
      _
  $region6: #{conv_block.2} parent=0 // loop_footer
    %s15 = sadd.s32 1, %s11
  $region7: #{conv_block.2} parent=0 // loop_footer_branch
    %10 = sbr.rel target = $region3
  $region8: #{conv_block.2} parent=0 // loop_exit
    _

</llo_original>
